<compile_context>
chip_gen: v7x
topology: tpu7x:2x2x1
jax: 0.10.0
libtpu: 0.0.40
codegen_flags: <defaults>
</compile_context>

<pallas_src>
import functools

import jax
import jax.numpy as jnp
from jax import lax
from jax.experimental import pallas as pl
from jax.experimental.pallas import tpu as pltpu


def _layernorm(x, gamma, beta, eps=1e-5):
    mu = jnp.mean(x, axis=-1, keepdims=True)
    var = jnp.mean(jnp.square(x - mu), axis=-1, keepdims=True)
    return (x - mu) * lax.rsqrt(var + eps) * gamma + beta


def _cet_kernel(roi_ref, img_ref, wc_ref, bc_ref, w2_ref, b2_ref,
                g1_ref, beta1_ref, wf1_ref, bf1_ref, wf2_ref, bf2_ref,
                g2_ref, beta2_ref, out_ref, *, approx_recip):
    """One grid step: TB images, N rois per image, everything per-image 2D."""
    TB = roi_ref.shape[0]

    wc, bc = wc_ref[...], bc_ref[...]
    w2, b2 = w2_ref[...], b2_ref[...]
    g1, be1 = g1_ref[...], beta1_ref[...]
    wf1, bf1 = wf1_ref[...], bf1_ref[...]
    wf2, bf2 = wf2_ref[...], bf2_ref[...]
    g2, be2 = g2_ref[...], beta2_ref[...]

    # TODO(synk): dropout layers are identity here (eval mode).
    for b in range(TB):                      # static unroll; TB is small (1..8)
        # folded (downsample1 + emb_roi): one matmul, low-precision operands,
        # f32 accumulation.
        emb = jnp.dot(roi_ref[b], wc,
                      preferred_element_type=jnp.float32) + bc          # (N, NFC)
        # downsample2: 1x1 conv == channel matmul over the 768-deep axis.
        img_c = jnp.dot(w2, img_ref[b],
                        preferred_element_type=jnp.float32) + b2        # (NFC, P)

        # attention over this image's own pixels (f32 math; no mask needed).
        s = jnp.dot(emb, img_c, preferred_element_type=jnp.float32)     # (N, P)
        s = s - jnp.max(s, axis=-1, keepdims=True)
        e = jnp.exp(s)
        denom = jnp.sum(e, axis=-1, keepdims=True)
        if approx_recip:
            attn = e * pl.reciprocal(denom, approx=True)                 # EUP slot
        else:
            attn = e / denom                                             # exact (f32 path)
        # ctx = attn @ img_c.T, contracting the pixel axis of both operands
        # (no transpose of img_c materialized).
        ctx = lax.dot_general(attn, img_c, (((1,), (1,)), ((), ())),
                              preferred_element_type=jnp.float32)        # (N, NFC)

        # residual + LN1, FFN (Linear/ReLU/Linear), residual + LN2 (all f32).
        x = _layernorm(ctx + emb, g1, be1)
        h = jnp.maximum(jnp.dot(x, wf1, preferred_element_type=jnp.float32) + bf1, 0.0)
        h = jnp.dot(h, wf2, preferred_element_type=jnp.float32) + bf2
        x = _layernorm(x + h, g2, be2)

        out_ref[b] = x.astype(out_ref.dtype)


def _pick_tb(BT, P):
    """Images per grid step.

    Targets >= ~256 image pixels per step to amortize per-step overhead, but
    (a) never pads the batch and (b) keeps >= 2 'parallel' grid steps whenever
    BT >= 2 so both v7x TensorCores get work.
    """
    tb = max(1, min(BT, -(-256 // max(P, 1)), 8))
    if BT >= 2:
        tb = max(1, min(tb, BT // 2))
    while BT % tb:
        tb -= 1
    return tb


def context_encoding_transformer(roi_feature, image_feature, params, *,
                                 mxu_dtype=jnp.bfloat16):
    """roi_feature: (BT*N, D, K, K), image_feature: (BT, 768, OH, OW) -> (BT*N, NFC).

    `mxu_dtype` is the operand dtype of the large matmul inputs (roi, image,
    folded roi weight, downsample2 weight); accumulation and all softmax /
    layernorm / FFN math stay float32.
    """
    BTN, D, K, _ = roi_feature.shape
    BT, CIMG, OH, OW = image_feature.shape
    N = BTN // BT
    KK = K * K
    P = OH * OW
    NFC = params["W1"].shape[0]

    TB = _pick_tb(BT, P)
    n_tiles = BT // TB

    # roi -> (BT, N, KK*D), column index = p*D + d (p = spatial tap).  This
    # transpose is tiny; the image below is a pure reshape -- no HBM round trip
    # for the big tensor.
    roi3 = roi_feature.transpose(0, 2, 3, 1).reshape(BT, N, KK * D).astype(mxu_dtype)
    # image -> (BT, CIMG, OH*OW): free reshape.  Ideally the upstream producer
    # already emits this tensor in `mxu_dtype` so the cast is a no-op.
    img3 = image_feature.reshape(BT, CIMG, P).astype(mxu_dtype)

    # Fold downsample1 (1x1 conv) + emb_roi Linear into one weight and bias:
    #   emb = roi3 @ w_comb + b_comb
    We_r = params["We"].reshape(NFC, NFC, KK)                    # [m, o, p]
    w_comb = jnp.einsum("od,mop->pdm", params["W1"], We_r,
                        precision=lax.Precision.HIGHEST).reshape(KK * D, NFC)
    b_comb = (jnp.einsum("o,mop->m", params["b1"], We_r,
                         precision=lax.Precision.HIGHEST) + params["be"])

    f32 = jnp.float32
    weights = (
        w_comb.astype(mxu_dtype),                     # (KK*D, NFC)  MXU operand
        b_comb.reshape(1, NFC).astype(f32),
        params["W2"].astype(mxu_dtype),               # (NFC, CIMG)  MXU operand
        params["b2"].reshape(NFC, 1).astype(f32),
        params["g1"].reshape(1, NFC).astype(f32),
        params["beta1"].reshape(1, NFC).astype(f32),
        params["Wf1"].T.astype(f32),                  # FFN weights are tiny; keep f32
        params["bf1"].reshape(1, NFC).astype(f32),
        params["Wf2"].T.astype(f32),
        params["bf2"].reshape(1, NFC).astype(f32),
        params["g2"].reshape(1, NFC).astype(f32),
        params["beta2"].reshape(1, NFC).astype(f32),
    )

    def _rep(a):
        return pl.BlockSpec(a.shape, lambda t, _nd=a.ndim: (0,) * _nd)

    in_specs = [
        pl.BlockSpec((TB, N, KK * D), lambda t: (t, 0, 0)),
        pl.BlockSpec((TB, CIMG, P), lambda t: (t, 0, 0)),
    ] + [_rep(a) for a in weights]

    approx = jnp.dtype(mxu_dtype) != jnp.dtype(jnp.float32)
    out = pl.pallas_call(
        functools.partial(_cet_kernel, approx_recip=approx),
        out_shape=jax.ShapeDtypeStruct((BT, N, NFC), jnp.float32),
        grid=(n_tiles,),
        in_specs=in_specs,
        out_specs=pl.BlockSpec((TB, N, NFC), lambda t: (t, 0, 0)),
        compiler_params=pltpu.CompilerParams(
            dimension_semantics=("parallel",)),
    )(roi3, img3, *weights)

    return out.reshape(BT * N, NFC)


def reference(roi, img, p):
    """Pure-JAX reference mirroring the PyTorch forward (layer_id=1, eval mode)."""
    HI = lax.Precision.HIGHEST
    NFC = p["W1"].shape[0]
    BTN, _, K, _ = roi.shape
    BT, _, OH, OW = img.shape
    N = BTN // BT
    ds1 = (jnp.einsum("od,ndhw->nohw", p["W1"], roi, precision=HI)
           + p["b1"][None, :, None, None])
    ds2 = (jnp.einsum("oc,bchw->bohw", p["W2"], img, precision=HI)
           + p["b2"][None, :, None, None])
    emb = jnp.matmul(ds1.reshape(BTN, NFC * K * K), p["We"].T, precision=HI) + p["be"]
    embb = emb.reshape(BT, N, NFC)
    imgf = ds2.reshape(BT, NFC, OH * OW)
    scores = jnp.einsum("bnc,bcp->bnp", embb, imgf, precision=HI)
    A = jax.nn.softmax(scores, axis=-1)
    ctx = jnp.einsum("bnp,bcp->bnc", A, imgf, precision=HI).reshape(BTN, NFC)

    def ln(x, g, b):
        mu = x.mean(-1, keepdims=True)
        var = ((x - mu) ** 2).mean(-1, keepdims=True)
        return (x - mu) / jnp.sqrt(var + 1e-5) * g + b

    x = ln(ctx + emb, p["g1"], p["beta1"])
    h = jnp.maximum(jnp.matmul(x, p["Wf1"].T, precision=HI) + p["bf1"], 0.0)
    h = jnp.matmul(h, p["Wf2"].T, precision=HI) + p["bf2"]
    return ln(x + h, p["g2"], p["beta2"])


def init_params(key, NFC, D, K, CIMG=768):
    ks = jax.random.split(key, 14)

    def rn(k, shape, scale):
        return jax.random.normal(k, shape, jnp.float32) * scale

    return dict(
        W1=rn(ks[0], (NFC, D), 0.25),            # downsample1 (1x1 conv)
        b1=rn(ks[1], (NFC,), 0.05),
        W2=rn(ks[2], (NFC, CIMG), 0.02),         # downsample2 (1x1 conv, 768 -> NFC)
        b2=rn(ks[3], (NFC,), 0.05),
        We=rn(ks[4], (NFC, NFC * K * K), 0.03),  # emb_roi Linear
        be=rn(ks[5], (NFC,), 0.05),
        g1=1.0 + rn(ks[6], (NFC,), 0.05),        # layernorm1
        beta1=rn(ks[7], (NFC,), 0.05),
        Wf1=rn(ks[8], (NFC, NFC), 0.08),         # FFN
        bf1=rn(ks[9], (NFC,), 0.05),
        Wf2=rn(ks[10], (NFC, NFC), 0.08),
        bf2=rn(ks[11], (NFC,), 0.05),
        g2=1.0 + rn(ks[12], (NFC,), 0.05),       # layernorm2
        beta2=rn(ks[13], (NFC,), 0.05),
    )


if __name__ == "__main__":
    BT, N, D, K, NFC, OH, OW, CIMG = 2, 12, 4, 3, 32, 4, 4, 768

    key = jax.random.PRNGKey(0)
    k_roi, k_img, k_par = jax.random.split(key, 3)
    roi_feature = jax.random.normal(k_roi, (BT * N, D, K, K), jnp.float32)
    image_feature = jax.random.normal(k_img, (BT, CIMG, OH, OW), jnp.float32)
    params = init_params(k_par, NFC, D, K, CIMG)

    ref = reference(roi_feature, image_feature, params)

    # Structural check: f32-operand kernel vs the high-precision f32 reference.
    out_f32 = jax.block_until_ready(
        context_encoding_transformer(roi_feature, image_feature, params,
                                     mxu_dtype=jnp.float32))
    assert out_f32.shape == (BT * N, NFC), out_f32.shape
    err_f32 = float(jnp.max(jnp.abs(out_f32 - ref)))
    assert err_f32 < 2e-3, f"f32 path max abs err {err_f32}"

    # Production path: bf16 MXU operands, f32 accumulation (looser tolerance
    # reflects bf16 input rounding, as anticipated by the perf review).
    out = jax.block_until_ready(
        context_encoding_transformer(roi_feature, image_feature, params))
    assert out.shape == (BT * N, NFC), out.shape
    assert jnp.allclose(out, ref, atol=1e-1, rtol=1e-1), \
        float(jnp.max(jnp.abs(out - ref)))

    print("KERNEL_OK")
</pallas_src>

<mosaic_0001>
module attributes {stable_mosaic.version = 11 : i64} {
  func.func @_cet_kernel(%arg0: i32, %arg1: memref<1x12x36xf32, #tpu.memory_space<vmem>>, %arg2: memref<1x768x16xf32, #tpu.memory_space<vmem>>, %arg3: memref<36x32xf32, #tpu.memory_space<vmem>>, %arg4: memref<1x32xf32, #tpu.memory_space<vmem>>, %arg5: memref<32x768xf32, #tpu.memory_space<vmem>>, %arg6: memref<32x1xf32, #tpu.memory_space<vmem>>, %arg7: memref<1x32xf32, #tpu.memory_space<vmem>>, %arg8: memref<1x32xf32, #tpu.memory_space<vmem>>, %arg9: memref<32x32xf32, #tpu.memory_space<vmem>>, %arg10: memref<1x32xf32, #tpu.memory_space<vmem>>, %arg11: memref<32x32xf32, #tpu.memory_space<vmem>>, %arg12: memref<1x32xf32, #tpu.memory_space<vmem>>, %arg13: memref<1x32xf32, #tpu.memory_space<vmem>>, %arg14: memref<1x32xf32, #tpu.memory_space<vmem>>, %arg15: memref<1x12x32xf32, #tpu.memory_space<vmem>>) attributes {dimension_semantics = [#tpu.dimension_semantics<parallel>], iteration_bounds = array<i64: 2>, scalar_prefetch = 0 : i64, scratch_operands = 0 : i64, tpu.core_type = #tpu.core_type<tc>, window_params = [{transform_indices = @transform_0, window_bounds = array<i64: 1, 12, 36>}, {transform_indices = @transform_1, window_bounds = array<i64: 1, 768, 16>}, {pipeline_mode = #tpu.pipeline_mode<synchronous>, transform_indices = @transform_2, window_bounds = array<i64: 36, 32>}, {pipeline_mode = #tpu.pipeline_mode<synchronous>, transform_indices = @transform_3, window_bounds = array<i64: 1, 32>}, {pipeline_mode = #tpu.pipeline_mode<synchronous>, transform_indices = @transform_4, window_bounds = array<i64: 32, 768>}, {pipeline_mode = #tpu.pipeline_mode<synchronous>, transform_indices = @transform_5, window_bounds = array<i64: 32, 1>}, {pipeline_mode = #tpu.pipeline_mode<synchronous>, transform_indices = @transform_6, window_bounds = array<i64: 1, 32>}, {pipeline_mode = #tpu.pipeline_mode<synchronous>, transform_indices = @transform_7, window_bounds = array<i64: 1, 32>}, {pipeline_mode = #tpu.pipeline_mode<synchronous>, transform_indices = @transform_8, window_bounds = array<i64: 32, 32>}, {pipeline_mode = #tpu.pipeline_mode<synchronous>, transform_indices = @transform_9, window_bounds = array<i64: 1, 32>}, {pipeline_mode = #tpu.pipeline_mode<synchronous>, transform_indices = @transform_10, window_bounds = array<i64: 32, 32>}, {pipeline_mode = #tpu.pipeline_mode<synchronous>, transform_indices = @transform_11, window_bounds = array<i64: 1, 32>}, {pipeline_mode = #tpu.pipeline_mode<synchronous>, transform_indices = @transform_12, window_bounds = array<i64: 1, 32>}, {pipeline_mode = #tpu.pipeline_mode<synchronous>, transform_indices = @transform_13, window_bounds = array<i64: 1, 32>}, {transform_indices = @transform_14, window_bounds = array<i64: 1, 12, 32>}]} {
    %c0 = arith.constant 0 : index
    %c0_0 = arith.constant 0 : index
    %0 = vector.load %arg3[%c0, %c0_0] : memref<36x32xf32, #tpu.memory_space<vmem>>, vector<36x32xf32>
    %c0_1 = arith.constant 0 : index
    %c0_2 = arith.constant 0 : index
    %1 = vector.load %arg4[%c0_1, %c0_2] : memref<1x32xf32, #tpu.memory_space<vmem>>, vector<1x32xf32>
    %c0_3 = arith.constant 0 : index
    %c0_4 = arith.constant 0 : index
    %2 = vector.load %arg5[%c0_3, %c0_4] : memref<32x768xf32, #tpu.memory_space<vmem>>, vector<32x768xf32>
    %c0_5 = arith.constant 0 : index
    %c0_6 = arith.constant 0 : index
    %3 = vector.load %arg6[%c0_5, %c0_6] : memref<32x1xf32, #tpu.memory_space<vmem>>, vector<32x1xf32>
    %c0_7 = arith.constant 0 : index
    %c0_8 = arith.constant 0 : index
    %4 = vector.load %arg7[%c0_7, %c0_8] : memref<1x32xf32, #tpu.memory_space<vmem>>, vector<1x32xf32>
    %c0_9 = arith.constant 0 : index
    %c0_10 = arith.constant 0 : index
    %5 = vector.load %arg8[%c0_9, %c0_10] : memref<1x32xf32, #tpu.memory_space<vmem>>, vector<1x32xf32>
    %c0_11 = arith.constant 0 : index
    %c0_12 = arith.constant 0 : index
    %6 = vector.load %arg9[%c0_11, %c0_12] : memref<32x32xf32, #tpu.memory_space<vmem>>, vector<32x32xf32>
    %c0_13 = arith.constant 0 : index
    %c0_14 = arith.constant 0 : index
    %7 = vector.load %arg10[%c0_13, %c0_14] : memref<1x32xf32, #tpu.memory_space<vmem>>, vector<1x32xf32>
    %c0_15 = arith.constant 0 : index
    %c0_16 = arith.constant 0 : index
    %8 = vector.load %arg11[%c0_15, %c0_16] : memref<32x32xf32, #tpu.memory_space<vmem>>, vector<32x32xf32>
    %c0_17 = arith.constant 0 : index
    %c0_18 = arith.constant 0 : index
    %9 = vector.load %arg12[%c0_17, %c0_18] : memref<1x32xf32, #tpu.memory_space<vmem>>, vector<1x32xf32>
    %c0_19 = arith.constant 0 : index
    %c0_20 = arith.constant 0 : index
    %10 = vector.load %arg13[%c0_19, %c0_20] : memref<1x32xf32, #tpu.memory_space<vmem>>, vector<1x32xf32>
    %c0_21 = arith.constant 0 : index
    %c0_22 = arith.constant 0 : index
    %11 = vector.load %arg14[%c0_21, %c0_22] : memref<1x32xf32, #tpu.memory_space<vmem>>, vector<1x32xf32>
    %c0_23 = arith.constant 0 : index
    %c0_24 = arith.constant 0 : index
    %c0_25 = arith.constant 0 : index
    %12 = vector.load %arg1[%c0_23, %c0_24, %c0_25] : memref<1x12x36xf32, #tpu.memory_space<vmem>>, vector<1x12x36xf32>
    %13 = vector.shape_cast %12 : vector<1x12x36xf32> to vector<12x36xf32>
    %cst = arith.constant dense<0.000000e+00> : vector<12x32xf32>
    %14 = tpu.matmul %13, %0, %cst {dimension_numbers = #tpu.dot_dimension_numbers<[1], [0], [0], [1], [0, 0, 1, 1], [], []>} : vector<12x36xf32>, vector<36x32xf32>, vector<12x32xf32> -> vector<12x32xf32>
    %15 = vector.broadcast %1 : vector<1x32xf32> to vector<12x32xf32>
    %16 = arith.addf %14, %15 : vector<12x32xf32>
    %c0_26 = arith.constant 0 : index
    %c0_27 = arith.constant 0 : index
    %c0_28 = arith.constant 0 : index
    %17 = vector.load %arg2[%c0_26, %c0_27, %c0_28] : memref<1x768x16xf32, #tpu.memory_space<vmem>>, vector<1x768x16xf32>
    %18 = vector.shape_cast %17 : vector<1x768x16xf32> to vector<768x16xf32>
    %cst_29 = arith.constant dense<0.000000e+00> : vector<32x16xf32>
    %19 = tpu.matmul %2, %18, %cst_29 {dimension_numbers = #tpu.dot_dimension_numbers<[1], [0], [0], [1], [0, 0, 1, 1], [], []>} : vector<32x768xf32>, vector<768x16xf32>, vector<32x16xf32> -> vector<32x16xf32>
    %20 = vector.broadcast %3 : vector<32x1xf32> to vector<32x16xf32>
    %21 = arith.addf %19, %20 : vector<32x16xf32>
    %cst_30 = arith.constant dense<0.000000e+00> : vector<12x16xf32>
    %22 = tpu.matmul %16, %21, %cst_30 {dimension_numbers = #tpu.dot_dimension_numbers<[1], [0], [0], [1], [0, 0, 1, 1], [], []>} : vector<12x32xf32>, vector<32x16xf32>, vector<12x16xf32> -> vector<12x16xf32>
    %cst_31 = arith.constant dense<0xFF800000> : vector<12xf32>
    %23 = vector.multi_reduction <maximumf>, %22, %cst_31 [1] : vector<12x16xf32> to vector<12xf32>
    %24 = vector.shape_cast %23 : vector<12xf32> to vector<12x1xf32>
    %25 = vector.broadcast %24 : vector<12x1xf32> to vector<12x16xf32>
    %26 = arith.subf %22, %25 : vector<12x16xf32>
    %27 = math.exp %26 : vector<12x16xf32>
    %cst_32 = arith.constant dense<0.000000e+00> : vector<12xf32>
    %28 = vector.multi_reduction <add>, %27, %cst_32 [1] : vector<12x16xf32> to vector<12xf32>
    %29 = vector.shape_cast %28 : vector<12xf32> to vector<12x1xf32>
    %30 = vector.broadcast %29 : vector<12x1xf32> to vector<12x16xf32>
    %31 = arith.divf %27, %30 : vector<12x16xf32>
    %cst_33 = arith.constant dense<0.000000e+00> : vector<12x32xf32>
    %32 = tpu.matmul %31, %21, %cst_33 {dimension_numbers = #tpu.dot_dimension_numbers<[1], [1], [0], [0], [0, 0, 1, 0], [], []>} : vector<12x16xf32>, vector<32x16xf32>, vector<12x32xf32> -> vector<12x32xf32>
    %33 = arith.addf %32, %16 : vector<12x32xf32>
    %cst_34 = arith.constant dense<0.000000e+00> : vector<12xf32>
    %34 = vector.multi_reduction <add>, %33, %cst_34 [1] : vector<12x32xf32> to vector<12xf32>
    %35 = vector.shape_cast %34 : vector<12xf32> to vector<12x1xf32>
    %cst_35 = arith.constant 3.200000e+01 : f32
    %36 = vector.broadcast %cst_35 : f32 to vector<12x1xf32>
    %37 = arith.divf %35, %36 : vector<12x1xf32>
    %38 = vector.broadcast %37 : vector<12x1xf32> to vector<12x32xf32>
    %39 = arith.subf %33, %38 : vector<12x32xf32>
    %40 = arith.mulf %39, %39 : vector<12x32xf32>
    %cst_36 = arith.constant dense<0.000000e+00> : vector<12xf32>
    %41 = vector.multi_reduction <add>, %40, %cst_36 [1] : vector<12x32xf32> to vector<12xf32>
    %42 = vector.shape_cast %41 : vector<12xf32> to vector<12x1xf32>
    %cst_37 = arith.constant 3.200000e+01 : f32
    %43 = vector.broadcast %cst_37 : f32 to vector<12x1xf32>
    %44 = arith.divf %42, %43 : vector<12x1xf32>
    %45 = vector.broadcast %37 : vector<12x1xf32> to vector<12x32xf32>
    %46 = arith.subf %33, %45 : vector<12x32xf32>
    %cst_38 = arith.constant 9.99999974E-6 : f32
    %47 = vector.broadcast %cst_38 : f32 to vector<12x1xf32>
    %48 = arith.addf %44, %47 : vector<12x1xf32>
    %49 = math.rsqrt %48 : vector<12x1xf32>
    %50 = vector.broadcast %49 : vector<12x1xf32> to vector<12x32xf32>
    %51 = arith.mulf %46, %50 : vector<12x32xf32>
    %52 = vector.broadcast %4 : vector<1x32xf32> to vector<12x32xf32>
    %53 = arith.mulf %51, %52 : vector<12x32xf32>
    %54 = vector.broadcast %5 : vector<1x32xf32> to vector<12x32xf32>
    %55 = arith.addf %53, %54 : vector<12x32xf32>
    %cst_39 = arith.constant dense<0.000000e+00> : vector<12x32xf32>
    %56 = tpu.matmul %55, %6, %cst_39 {dimension_numbers = #tpu.dot_dimension_numbers<[1], [0], [0], [1], [0, 0, 1, 1], [], []>} : vector<12x32xf32>, vector<32x32xf32>, vector<12x32xf32> -> vector<12x32xf32>
    %57 = vector.broadcast %7 : vector<1x32xf32> to vector<12x32xf32>
    %58 = arith.addf %56, %57 : vector<12x32xf32>
    %cst_40 = arith.constant 0.000000e+00 : f32
    %59 = vector.broadcast %cst_40 : f32 to vector<12x32xf32>
    %60 = arith.maximumf %58, %59 : vector<12x32xf32>
    %cst_41 = arith.constant dense<0.000000e+00> : vector<12x32xf32>
    %61 = tpu.matmul %60, %8, %cst_41 {dimension_numbers = #tpu.dot_dimension_numbers<[1], [0], [0], [1], [0, 0, 1, 1], [], []>} : vector<12x32xf32>, vector<32x32xf32>, vector<12x32xf32> -> vector<12x32xf32>
    %62 = vector.broadcast %9 : vector<1x32xf32> to vector<12x32xf32>
    %63 = arith.addf %61, %62 : vector<12x32xf32>
    %64 = arith.addf %55, %63 : vector<12x32xf32>
    %cst_42 = arith.constant dense<0.000000e+00> : vector<12xf32>
    %65 = vector.multi_reduction <add>, %64, %cst_42 [1] : vector<12x32xf32> to vector<12xf32>
    %66 = vector.shape_cast %65 : vector<12xf32> to vector<12x1xf32>
    %cst_43 = arith.constant 3.200000e+01 : f32
    %67 = vector.broadcast %cst_43 : f32 to vector<12x1xf32>
    %68 = arith.divf %66, %67 : vector<12x1xf32>
    %69 = vector.broadcast %68 : vector<12x1xf32> to vector<12x32xf32>
    %70 = arith.subf %64, %69 : vector<12x32xf32>
    %71 = arith.mulf %70, %70 : vector<12x32xf32>
    %cst_44 = arith.constant dense<0.000000e+00> : vector<12xf32>
    %72 = vector.multi_reduction <add>, %71, %cst_44 [1] : vector<12x32xf32> to vector<12xf32>
    %73 = vector.shape_cast %72 : vector<12xf32> to vector<12x1xf32>
    %cst_45 = arith.constant 3.200000e+01 : f32
    %74 = vector.broadcast %cst_45 : f32 to vector<12x1xf32>
    %75 = arith.divf %73, %74 : vector<12x1xf32>
    %76 = vector.broadcast %68 : vector<12x1xf32> to vector<12x32xf32>
    %77 = arith.subf %64, %76 : vector<12x32xf32>
    %cst_46 = arith.constant 9.99999974E-6 : f32
    %78 = vector.broadcast %cst_46 : f32 to vector<12x1xf32>
    %79 = arith.addf %75, %78 : vector<12x1xf32>
    %80 = math.rsqrt %79 : vector<12x1xf32>
    %81 = vector.broadcast %80 : vector<12x1xf32> to vector<12x32xf32>
    %82 = arith.mulf %77, %81 : vector<12x32xf32>
    %83 = vector.broadcast %10 : vector<1x32xf32> to vector<12x32xf32>
    %84 = arith.mulf %82, %83 : vector<12x32xf32>
    %85 = vector.broadcast %11 : vector<1x32xf32> to vector<12x32xf32>
    %86 = arith.addf %84, %85 : vector<12x32xf32>
    %c0_47 = arith.constant 0 : index
    %c0_48 = arith.constant 0 : index
    %c0_49 = arith.constant 0 : index
    %87 = vector.load %arg15[%c0_47, %c0_48, %c0_49] : memref<1x12x32xf32, #tpu.memory_space<vmem>>, vector<1x12x32xf32>
    %88 = vector.shape_cast %87 : vector<1x12x32xf32> to vector<12x32xf32>
    %89 = vector.shape_cast %86 : vector<12x32xf32> to vector<1x12x32xf32>
    tpu.vector_store %arg15[%c0_47, %c0_48, %c0_49], %89 {strides = array<i32>} : memref<1x12x32xf32, #tpu.memory_space<vmem>>, vector<1x12x32xf32>,
    return
  }
  func.func @transform_0(%arg0: i32) -> (i32, i32, i32) {
    %c0_i32 = arith.constant 0 : i32
    %c0_i32_0 = arith.constant 0 : i32
    %c0_i32_1 = arith.constant 0 : i32
    return %arg0, %c0_i32, %c0_i32_0 : i32, i32, i32
  }
  func.func @transform_1(%arg0: i32) -> (i32, i32, i32) {
    %c0_i32 = arith.constant 0 : i32
    %c0_i32_0 = arith.constant 0 : i32
    %c0_i32_1 = arith.constant 0 : i32
    return %arg0, %c0_i32, %c0_i32_0 : i32, i32, i32
  }
  func.func @transform_2(%arg0: i32) -> (i32, i32) {
    %c0_i32 = arith.constant 0 : i32
    %c0_i32_0 = arith.constant 0 : i32
    %c0_i32_1 = arith.constant 0 : i32
    return %c0_i32, %c0_i32_0 : i32, i32
  }
  func.func @transform_3(%arg0: i32) -> (i32, i32) {
    %c0_i32 = arith.constant 0 : i32
    %c0_i32_0 = arith.constant 0 : i32
    %c0_i32_1 = arith.constant 0 : i32
    return %c0_i32, %c0_i32_0 : i32, i32
  }
  func.func @transform_4(%arg0: i32) -> (i32, i32) {
    %c0_i32 = arith.constant 0 : i32
    %c0_i32_0 = arith.constant 0 : i32
    %c0_i32_1 = arith.constant 0 : i32
    return %c0_i32, %c0_i32_0 : i32, i32
  }
  func.func @transform_5(%arg0: i32) -> (i32, i32) {
    %c0_i32 = arith.constant 0 : i32
    %c0_i32_0 = arith.constant 0 : i32
    %c0_i32_1 = arith.constant 0 : i32
    return %c0_i32, %c0_i32_0 : i32, i32
  }
  func.func @transform_6(%arg0: i32) -> (i32, i32) {
    %c0_i32 = arith.constant 0 : i32
    %c0_i32_0 = arith.constant 0 : i32
    %c0_i32_1 = arith.constant 0 : i32
    return %c0_i32, %c0_i32_0 : i32, i32
  }
  func.func @transform_7(%arg0: i32) -> (i32, i32) {
    %c0_i32 = arith.constant 0 : i32
    %c0_i32_0 = arith.constant 0 : i32
    %c0_i32_1 = arith.constant 0 : i32
    return %c0_i32, %c0_i32_0 : i32, i32
  }
  func.func @transform_8(%arg0: i32) -> (i32, i32) {
    %c0_i32 = arith.constant 0 : i32
    %c0_i32_0 = arith.constant 0 : i32
    %c0_i32_1 = arith.constant 0 : i32
    return %c0_i32, %c0_i32_0 : i32, i32
  }
  func.func @transform_9(%arg0: i32) -> (i32, i32) {
    %c0_i32 = arith.constant 0 : i32
    %c0_i32_0 = arith.constant 0 : i32
    %c0_i32_1 = arith.constant 0 : i32
    return %c0_i32, %c0_i32_0 : i32, i32
  }
  func.func @transform_10(%arg0: i32) -> (i32, i32) {
    %c0_i32 = arith.constant 0 : i32
    %c0_i32_0 = arith.constant 0 : i32
    %c0_i32_1 = arith.constant 0 : i32
    return %c0_i32, %c0_i32_0 : i32, i32
  }
  func.func @transform_11(%arg0: i32) -> (i32, i32) {
    %c0_i32 = arith.constant 0 : i32
    %c0_i32_0 = arith.constant 0 : i32
    %c0_i32_1 = arith.constant 0 : i32
    return %c0_i32, %c0_i32_0 : i32, i32
  }
  func.func @transform_12(%arg0: i32) -> (i32, i32) {
    %c0_i32 = arith.constant 0 : i32
    %c0_i32_0 = arith.constant 0 : i32
    %c0_i32_1 = arith.constant 0 : i32
    return %c0_i32, %c0_i32_0 : i32, i32
  }
  func.func @transform_13(%arg0: i32) -> (i32, i32) {
    %c0_i32 = arith.constant 0 : i32
    %c0_i32_0 = arith.constant 0 : i32
    %c0_i32_1 = arith.constant 0 : i32
    return %c0_i32, %c0_i32_0 : i32, i32
  }
  func.func @transform_14(%arg0: i32) -> (i32, i32, i32) {
    %c0_i32 = arith.constant 0 : i32
    %c0_i32_0 = arith.constant 0 : i32
    %c0_i32_1 = arith.constant 0 : i32
    return %arg0, %c0_i32, %c0_i32_0 : i32, i32, i32
  }
}

</mosaic_0001>

<llo_original>
// kernel: tpu_custom_call.1
$region0: #{tpu_custom_call.1}
  #allocation0 [shape = 'u32[]', space=smem, size = 0x4, offset = 0x4, fixed_abs, tag = 'smem constant byte address 0x4 - core index']
  #allocation1 [shape = 'u32[144,128]{1,0:T(1,128)}', space=vmem, size = 0x12000, scoped, tag = 'internal scratch']
  %s0 = inlined_call_operand.vmem [shape: f32[2,12,36], index: 0, kind: input, shape index: {}]
  %s1 = inlined_call_operand.vmem [shape: f32[2,768,16], index: 1, kind: input, shape index: {}]
  %s2 = inlined_call_operand.vmem [shape: f32[36,32], index: 2, kind: input, shape index: {}]
  %s3 = inlined_call_operand.vmem [shape: f32[1,32], index: 3, kind: input, shape index: {}]
  %s4 = inlined_call_operand.vmem [shape: f32[32,768], index: 4, kind: input, shape index: {}]
  %s5 = inlined_call_operand.vmem [shape: f32[32,1], index: 5, kind: input, shape index: {}]
  %s6 = inlined_call_operand.vmem [shape: f32[1,32], index: 6, kind: input, shape index: {}]
  %s7 = inlined_call_operand.vmem [shape: f32[1,32], index: 7, kind: input, shape index: {}]
  %s8 = inlined_call_operand.vmem [shape: f32[32,32], index: 8, kind: input, shape index: {}]
  %s9 = inlined_call_operand.vmem [shape: f32[1,32], index: 9, kind: input, shape index: {}]
  %s10 = inlined_call_operand.vmem [shape: f32[32,32], index: 10, kind: input, shape index: {}]
  %s11 = inlined_call_operand.vmem [shape: f32[1,32], index: 11, kind: input, shape index: {}]
  %s12 = inlined_call_operand.vmem [shape: f32[1,32], index: 12, kind: input, shape index: {}]
  %s13 = inlined_call_operand.vmem [shape: f32[1,32], index: 13, kind: input, shape index: {}]
  %s14 = inlined_call_operand.vmem [shape: f32[2,12,32], index: 14, kind: output, shape index: {}]
  %s15 = sld [smem:[#allocation0]]
  $region89: #{tpu_custom_call.1} parent=0
    _
  %s17 = ssub.s32 1, %s15
  %s18 = scalar_select 0, %s17, %s15
  loop: start=0, step=1, limit=4
  $region2: #{tpu_custom_call.1} parent=0 // loop_pre_header
    _
  $region3: #{tpu_custom_call.1} parent=0 // loop_header
    %s20 = sphi 0, %s24
    %p21 = scmp.ge.s32.totalorder %s20, 4
    %s30 = sphi 0, %s32
    %s33 = sphi 0, %s30
    %s34 = sphi 0, %s33
    %s50 = sphi 0, %s34
    %s56 = sphi 0, %s58
    %s59 = sphi 0, %s56
    %s60 = sphi 0, %s59
    %s76 = sphi 0, %s60
    %s80 = sphi 0, %s80
    %s82 = sphi 0, %s80
    %s83 = sphi 0, %s82
    %s97 = sphi 0, %s83
    %s101 = sphi 0, %s101
    %s103 = sphi 0, %s101
    %s104 = sphi 0, %s103
    %s118 = sphi 0, %s104
    %s122 = sphi 0, %s122
    %s124 = sphi 0, %s122
    %s125 = sphi 0, %s124
    %s139 = sphi 0, %s125
    %s143 = sphi 0, %s143
    %s145 = sphi 0, %s143
    %s146 = sphi 0, %s145
    %s160 = sphi 0, %s146
    %s164 = sphi 0, %s164
    %s166 = sphi 0, %s164
    %s167 = sphi 0, %s166
    %s181 = sphi 0, %s167
    %s185 = sphi 0, %s185
    %s187 = sphi 0, %s185
    %s188 = sphi 0, %s187
    %s202 = sphi 0, %s188
    %s206 = sphi 0, %s206
    %s208 = sphi 0, %s206
    %s209 = sphi 0, %s208
    %s223 = sphi 0, %s209
    %s227 = sphi 0, %s227
    %s229 = sphi 0, %s227
    %s230 = sphi 0, %s229
    %s244 = sphi 0, %s230
    %s248 = sphi 0, %s248
    %s250 = sphi 0, %s248
    %s251 = sphi 0, %s250
    %s265 = sphi 0, %s251
    %s269 = sphi 0, %s269
    %s271 = sphi 0, %s269
    %s272 = sphi 0, %s271
    %s286 = sphi 0, %s272
    %s290 = sphi 0, %s290
    %s292 = sphi 0, %s290
    %s293 = sphi 0, %s292
    %s307 = sphi 0, %s293
    %s311 = sphi 0, %s311
    %s313 = sphi 0, %s311
    %s314 = sphi 0, %s313
    %s328 = sphi 0, %s314
    %s334 = sphi 0, %s336
    %s337 = sphi 0, %s334
    %s338 = sphi 0, %s337
    %s354 = sphi 0, %s338
  $region4: #{tpu_custom_call.1} parent=0 // loop_header_branch
    %23 = sbr.rel (%p21) target = $region8
  $region5: #{tpu_custom_call.1} parent=0 // loop_body
    %s25 = ssub.s32 %s20, 1
    %s26 = ssub.s32 %s20, 2
    %s27 = sadd.s32 %s20, 1
    %s28 = ssub.s32 %s20, %s27
    %p29 = scmp.eq.s32.totalorder %s28, 0
    %s31 = sadd.s32 %s30, 1
    %s32 = scalar_select %p29, %s30, %s31
    %p35 = pneg %p29
    %p36 = scmp.eq.s32.totalorder %s20, 1
    %p37 = por %p35, %p36
    %p38 = scmp.ne.s32.totalorder %s30, %s33
    %p39 = scmp.eq.s32.totalorder %s20, 0
    %p40 = por %p38, %p39
    %p41 = scmp.ne.s32.totalorder %s30, %s33
    %p42 = scmp.eq.s32.totalorder %s25, 1
    %p43 = por %p41, %p42
    %p44 = scmp.ne.s32.totalorder %s33, %s34
    %p45 = scmp.eq.s32.totalorder %s25, 0
    %p46 = por %p44, %p45
    %p47 = scmp.ne.s32.totalorder %s33, %s34
    %p48 = scmp.eq.s32.totalorder %s26, 1
    %p49 = por %p47, %p48
    %p51 = scmp.ne.s32.totalorder %s34, %s50
    %p52 = scmp.eq.s32.totalorder %s26, 0
    %p53 = por %p51, %p52
    %s54 = ssub.s32 %s20, %s27
    %p55 = scmp.eq.s32.totalorder %s54, 0
    %s57 = sadd.s32 %s56, 1
    %s58 = scalar_select %p55, %s56, %s57
    %p61 = pneg %p55
    %p62 = scmp.eq.s32.totalorder %s20, 1
    %p63 = por %p61, %p62
    %p64 = scmp.ne.s32.totalorder %s56, %s59
    %p65 = scmp.eq.s32.totalorder %s20, 0
    %p66 = por %p64, %p65
    %p67 = scmp.ne.s32.totalorder %s56, %s59
    %p68 = scmp.eq.s32.totalorder %s25, 1
    %p69 = por %p67, %p68
    %p70 = scmp.ne.s32.totalorder %s59, %s60
    %p71 = scmp.eq.s32.totalorder %s25, 0
    %p72 = por %p70, %p71
    %p73 = scmp.ne.s32.totalorder %s59, %s60
    %p74 = scmp.eq.s32.totalorder %s26, 1
    %p75 = por %p73, %p74
    %p77 = scmp.ne.s32.totalorder %s60, %s76
    %p78 = scmp.eq.s32.totalorder %s26, 0
    %p79 = por %p77, %p78
    %s81 = sadd.s32 %s80, 1
    %p84 = scmp.eq.s32.totalorder %s20, 1
    %p85 = scmp.ne.s32.totalorder %s80, %s82
    %p86 = scmp.eq.s32.totalorder %s20, 0
    %p87 = por %p85, %p86
    %p88 = scmp.ne.s32.totalorder %s80, %s82
    %p89 = scmp.eq.s32.totalorder %s25, 1
    %p90 = por %p88, %p89
    %p91 = scmp.ne.s32.totalorder %s82, %s83
    %p92 = scmp.eq.s32.totalorder %s25, 0
    %p93 = por %p91, %p92
    %p94 = scmp.ne.s32.totalorder %s82, %s83
    %p95 = scmp.eq.s32.totalorder %s26, 1
    %p96 = por %p94, %p95
    %p98 = scmp.ne.s32.totalorder %s83, %s97
    %p99 = scmp.eq.s32.totalorder %s26, 0
    %p100 = por %p98, %p99
    %s102 = sadd.s32 %s101, 1
    %p105 = scmp.eq.s32.totalorder %s20, 1
    %p106 = scmp.ne.s32.totalorder %s101, %s103
    %p107 = scmp.eq.s32.totalorder %s20, 0
    %p108 = por %p106, %p107
    %p109 = scmp.ne.s32.totalorder %s101, %s103
    %p110 = scmp.eq.s32.totalorder %s25, 1
    %p111 = por %p109, %p110
    %p112 = scmp.ne.s32.totalorder %s103, %s104
    %p113 = scmp.eq.s32.totalorder %s25, 0
    %p114 = por %p112, %p113
    %p115 = scmp.ne.s32.totalorder %s103, %s104
    %p116 = scmp.eq.s32.totalorder %s26, 1
    %p117 = por %p115, %p116
    %p119 = scmp.ne.s32.totalorder %s104, %s118
    %p120 = scmp.eq.s32.totalorder %s26, 0
    %p121 = por %p119, %p120
    %s123 = sadd.s32 %s122, 1
    %p126 = scmp.eq.s32.totalorder %s20, 1
    %p127 = scmp.ne.s32.totalorder %s122, %s124
    %p128 = scmp.eq.s32.totalorder %s20, 0
    %p129 = por %p127, %p128
    %p130 = scmp.ne.s32.totalorder %s122, %s124
    %p131 = scmp.eq.s32.totalorder %s25, 1
    %p132 = por %p130, %p131
    %p133 = scmp.ne.s32.totalorder %s124, %s125
    %p134 = scmp.eq.s32.totalorder %s25, 0
    %p135 = por %p133, %p134
    %p136 = scmp.ne.s32.totalorder %s124, %s125
    %p137 = scmp.eq.s32.totalorder %s26, 1
    %p138 = por %p136, %p137
    %p140 = scmp.ne.s32.totalorder %s125, %s139
    %p141 = scmp.eq.s32.totalorder %s26, 0
    %p142 = por %p140, %p141
    %s144 = sadd.s32 %s143, 1
    %p147 = scmp.eq.s32.totalorder %s20, 1
    %p148 = scmp.ne.s32.totalorder %s143, %s145
    %p149 = scmp.eq.s32.totalorder %s20, 0
    %p150 = por %p148, %p149
    %p151 = scmp.ne.s32.totalorder %s143, %s145
    %p152 = scmp.eq.s32.totalorder %s25, 1
    %p153 = por %p151, %p152
    %p154 = scmp.ne.s32.totalorder %s145, %s146
    %p155 = scmp.eq.s32.totalorder %s25, 0
    %p156 = por %p154, %p155
    %p157 = scmp.ne.s32.totalorder %s145, %s146
    %p158 = scmp.eq.s32.totalorder %s26, 1
    %p159 = por %p157, %p158
    %p161 = scmp.ne.s32.totalorder %s146, %s160
    %p162 = scmp.eq.s32.totalorder %s26, 0
    %p163 = por %p161, %p162
    %s165 = sadd.s32 %s164, 1
    %p168 = scmp.eq.s32.totalorder %s20, 1
    %p169 = scmp.ne.s32.totalorder %s164, %s166
    %p170 = scmp.eq.s32.totalorder %s20, 0
    %p171 = por %p169, %p170
    %p172 = scmp.ne.s32.totalorder %s164, %s166
    %p173 = scmp.eq.s32.totalorder %s25, 1
    %p174 = por %p172, %p173
    %p175 = scmp.ne.s32.totalorder %s166, %s167
    %p176 = scmp.eq.s32.totalorder %s25, 0
    %p177 = por %p175, %p176
    %p178 = scmp.ne.s32.totalorder %s166, %s167
    %p179 = scmp.eq.s32.totalorder %s26, 1
    %p180 = por %p178, %p179
    %p182 = scmp.ne.s32.totalorder %s167, %s181
    %p183 = scmp.eq.s32.totalorder %s26, 0
    %p184 = por %p182, %p183
    %s186 = sadd.s32 %s185, 1
    %p189 = scmp.eq.s32.totalorder %s20, 1
    %p190 = scmp.ne.s32.totalorder %s185, %s187
    %p191 = scmp.eq.s32.totalorder %s20, 0
    %p192 = por %p190, %p191
    %p193 = scmp.ne.s32.totalorder %s185, %s187
    %p194 = scmp.eq.s32.totalorder %s25, 1
    %p195 = por %p193, %p194
    %p196 = scmp.ne.s32.totalorder %s187, %s188
    %p197 = scmp.eq.s32.totalorder %s25, 0
    %p198 = por %p196, %p197
    %p199 = scmp.ne.s32.totalorder %s187, %s188
    %p200 = scmp.eq.s32.totalorder %s26, 1
    %p201 = por %p199, %p200
    %p203 = scmp.ne.s32.totalorder %s188, %s202
    %p204 = scmp.eq.s32.totalorder %s26, 0
    %p205 = por %p203, %p204
    %s207 = sadd.s32 %s206, 1
    %p210 = scmp.eq.s32.totalorder %s20, 1
    %p211 = scmp.ne.s32.totalorder %s206, %s208
    %p212 = scmp.eq.s32.totalorder %s20, 0
    %p213 = por %p211, %p212
    %p214 = scmp.ne.s32.totalorder %s206, %s208
    %p215 = scmp.eq.s32.totalorder %s25, 1
    %p216 = por %p214, %p215
    %p217 = scmp.ne.s32.totalorder %s208, %s209
    %p218 = scmp.eq.s32.totalorder %s25, 0
    %p219 = por %p217, %p218
    %p220 = scmp.ne.s32.totalorder %s208, %s209
    %p221 = scmp.eq.s32.totalorder %s26, 1
    %p222 = por %p220, %p221
    %p224 = scmp.ne.s32.totalorder %s209, %s223
    %p225 = scmp.eq.s32.totalorder %s26, 0
    %p226 = por %p224, %p225
    %s228 = sadd.s32 %s227, 1
    %p231 = scmp.eq.s32.totalorder %s20, 1
    %p232 = scmp.ne.s32.totalorder %s227, %s229
    %p233 = scmp.eq.s32.totalorder %s20, 0
    %p234 = por %p232, %p233
    %p235 = scmp.ne.s32.totalorder %s227, %s229
    %p236 = scmp.eq.s32.totalorder %s25, 1
    %p237 = por %p235, %p236
    %p238 = scmp.ne.s32.totalorder %s229, %s230
    %p239 = scmp.eq.s32.totalorder %s25, 0
    %p240 = por %p238, %p239
    %p241 = scmp.ne.s32.totalorder %s229, %s230
    %p242 = scmp.eq.s32.totalorder %s26, 1
    %p243 = por %p241, %p242
    %p245 = scmp.ne.s32.totalorder %s230, %s244
    %p246 = scmp.eq.s32.totalorder %s26, 0
    %p247 = por %p245, %p246
    %s249 = sadd.s32 %s248, 1
    %p252 = scmp.eq.s32.totalorder %s20, 1
    %p253 = scmp.ne.s32.totalorder %s248, %s250
    %p254 = scmp.eq.s32.totalorder %s20, 0
    %p255 = por %p253, %p254
    %p256 = scmp.ne.s32.totalorder %s248, %s250
    %p257 = scmp.eq.s32.totalorder %s25, 1
    %p258 = por %p256, %p257
    %p259 = scmp.ne.s32.totalorder %s250, %s251
    %p260 = scmp.eq.s32.totalorder %s25, 0
    %p261 = por %p259, %p260
    %p262 = scmp.ne.s32.totalorder %s250, %s251
    %p263 = scmp.eq.s32.totalorder %s26, 1
    %p264 = por %p262, %p263
    %p266 = scmp.ne.s32.totalorder %s251, %s265
    %p267 = scmp.eq.s32.totalorder %s26, 0
    %p268 = por %p266, %p267
    %s270 = sadd.s32 %s269, 1
    %p273 = scmp.eq.s32.totalorder %s20, 1
    %p274 = scmp.ne.s32.totalorder %s269, %s271
    %p275 = scmp.eq.s32.totalorder %s20, 0
    %p276 = por %p274, %p275
    %p277 = scmp.ne.s32.totalorder %s269, %s271
    %p278 = scmp.eq.s32.totalorder %s25, 1
    %p279 = por %p277, %p278
    %p280 = scmp.ne.s32.totalorder %s271, %s272
    %p281 = scmp.eq.s32.totalorder %s25, 0
    %p282 = por %p280, %p281
    %p283 = scmp.ne.s32.totalorder %s271, %s272
    %p284 = scmp.eq.s32.totalorder %s26, 1
    %p285 = por %p283, %p284
    %p287 = scmp.ne.s32.totalorder %s272, %s286
    %p288 = scmp.eq.s32.totalorder %s26, 0
    %p289 = por %p287, %p288
    %s291 = sadd.s32 %s290, 1
    %p294 = scmp.eq.s32.totalorder %s20, 1
    %p295 = scmp.ne.s32.totalorder %s290, %s292
    %p296 = scmp.eq.s32.totalorder %s20, 0
    %p297 = por %p295, %p296
    %p298 = scmp.ne.s32.totalorder %s290, %s292
    %p299 = scmp.eq.s32.totalorder %s25, 1
    %p300 = por %p298, %p299
    %p301 = scmp.ne.s32.totalorder %s292, %s293
    %p302 = scmp.eq.s32.totalorder %s25, 0
    %p303 = por %p301, %p302
    %p304 = scmp.ne.s32.totalorder %s292, %s293
    %p305 = scmp.eq.s32.totalorder %s26, 1
    %p306 = por %p304, %p305
    %p308 = scmp.ne.s32.totalorder %s293, %s307
    %p309 = scmp.eq.s32.totalorder %s26, 0
    %p310 = por %p308, %p309
    %s312 = sadd.s32 %s311, 1
    %p315 = scmp.eq.s32.totalorder %s20, 1
    %p316 = scmp.ne.s32.totalorder %s311, %s313
    %p317 = scmp.eq.s32.totalorder %s20, 0
    %p318 = por %p316, %p317
    %p319 = scmp.ne.s32.totalorder %s311, %s313
    %p320 = scmp.eq.s32.totalorder %s25, 1
    %p321 = por %p319, %p320
    %p322 = scmp.ne.s32.totalorder %s313, %s314
    %p323 = scmp.eq.s32.totalorder %s25, 0
    %p324 = por %p322, %p323
    %p325 = scmp.ne.s32.totalorder %s313, %s314
    %p326 = scmp.eq.s32.totalorder %s26, 1
    %p327 = por %p325, %p326
    %p329 = scmp.ne.s32.totalorder %s314, %s328
    %p330 = scmp.eq.s32.totalorder %s26, 0
    %p331 = por %p329, %p330
    %s332 = ssub.s32 %s20, %s27
    %p333 = scmp.eq.s32.totalorder %s332, 0
    %s335 = sadd.s32 %s334, 1
    %s336 = scalar_select %p333, %s334, %s335
    %p339 = pneg %p333
    %p340 = scmp.eq.s32.totalorder %s20, 1
    %p341 = por %p339, %p340
    %p342 = scmp.ne.s32.totalorder %s334, %s337
    %p343 = scmp.eq.s32.totalorder %s20, 0
    %p344 = por %p342, %p343
    %p345 = scmp.ne.s32.totalorder %s334, %s337
    %p346 = scmp.eq.s32.totalorder %s25, 1
    %p347 = por %p345, %p346
    %p348 = scmp.ne.s32.totalorder %s337, %s338
    %p349 = scmp.eq.s32.totalorder %s25, 0
    %p350 = por %p348, %p349
    %p351 = scmp.ne.s32.totalorder %s337, %s338
    %p352 = scmp.eq.s32.totalorder %s26, 1
    %p353 = por %p351, %p352
    %p355 = scmp.ne.s32.totalorder %s338, %s354
    %p356 = scmp.eq.s32.totalorder %s26, 0
    %p357 = por %p355, %p356
    %p358 = scmp.le.s32.totalorder 1, %s20
    %p359 = scmp.lt.s32.totalorder %s20, 3
    %p360 = pnand %p358, %p359
    %p361 = pneg %p360
    // Predicated region
    $region9: #{tpu_custom_call.1} parent=5 // pred_check
      _
    $region10: #{tpu_custom_call.1} parent=5 // pred_check_branch
      %363 = sbr.rel (%p360) target = $region12
    $region11: #{tpu_custom_call.1} parent=5 // pred_region
      %s364 = ssub.s32 %s20, 1
      // Predicated region
      $region13: #{tpu_custom_call.1} parent=11 // pred_check
        %p365 = pneg %p93
      $region14: #{tpu_custom_call.1} parent=11 // pred_check_branch
        %367 = sbr.rel (%p365) target = $region16
      $region15: #{tpu_custom_call.1} parent=11 // pred_region
        _
      $region16: #{tpu_custom_call.1} parent=11 // pred_fallthru
        _
      // Predicated region
      $region17: #{tpu_custom_call.1} parent=11 // pred_check
        %p368 = pneg %p114
      $region18: #{tpu_custom_call.1} parent=11 // pred_check_branch
        %370 = sbr.rel (%p368) target = $region20
      $region19: #{tpu_custom_call.1} parent=11 // pred_region
        _
      $region20: #{tpu_custom_call.1} parent=11 // pred_fallthru
        _
      // Predicated region
      $region21: #{tpu_custom_call.1} parent=11 // pred_check
        %p371 = pneg %p135
      $region22: #{tpu_custom_call.1} parent=11 // pred_check_branch
        %373 = sbr.rel (%p371) target = $region24
      $region23: #{tpu_custom_call.1} parent=11 // pred_region
        _
      $region24: #{tpu_custom_call.1} parent=11 // pred_fallthru
        _
      // Predicated region
      $region25: #{tpu_custom_call.1} parent=11 // pred_check
        %p374 = pneg %p156
      $region26: #{tpu_custom_call.1} parent=11 // pred_check_branch
        %376 = sbr.rel (%p374) target = $region28
      $region27: #{tpu_custom_call.1} parent=11 // pred_region
        _
      $region28: #{tpu_custom_call.1} parent=11 // pred_fallthru
        _
      // Predicated region
      $region29: #{tpu_custom_call.1} parent=11 // pred_check
        %p377 = pneg %p177
      $region30: #{tpu_custom_call.1} parent=11 // pred_check_branch
        %379 = sbr.rel (%p377) target = $region32
      $region31: #{tpu_custom_call.1} parent=11 // pred_region
        _
      $region32: #{tpu_custom_call.1} parent=11 // pred_fallthru
        _
      // Predicated region
      $region33: #{tpu_custom_call.1} parent=11 // pred_check
        %p380 = pneg %p198
      $region34: #{tpu_custom_call.1} parent=11 // pred_check_branch
        %382 = sbr.rel (%p380) target = $region36
      $region35: #{tpu_custom_call.1} parent=11 // pred_region
        _
      $region36: #{tpu_custom_call.1} parent=11 // pred_fallthru
        _
      // Predicated region
      $region37: #{tpu_custom_call.1} parent=11 // pred_check
        %p383 = pneg %p219
      $region38: #{tpu_custom_call.1} parent=11 // pred_check_branch
        %385 = sbr.rel (%p383) target = $region40
      $region39: #{tpu_custom_call.1} parent=11 // pred_region
        _
      $region40: #{tpu_custom_call.1} parent=11 // pred_fallthru
        _
      // Predicated region
      $region41: #{tpu_custom_call.1} parent=11 // pred_check
        %p386 = pneg %p240
      $region42: #{tpu_custom_call.1} parent=11 // pred_check_branch
        %388 = sbr.rel (%p386) target = $region44
      $region43: #{tpu_custom_call.1} parent=11 // pred_region
        _
      $region44: #{tpu_custom_call.1} parent=11 // pred_fallthru
        _
      // Predicated region
      $region45: #{tpu_custom_call.1} parent=11 // pred_check
        %p389 = pneg %p261
      $region46: #{tpu_custom_call.1} parent=11 // pred_check_branch
        %391 = sbr.rel (%p389) target = $region48
      $region47: #{tpu_custom_call.1} parent=11 // pred_region
        _
      $region48: #{tpu_custom_call.1} parent=11 // pred_fallthru
        _
      // Predicated region
      $region49: #{tpu_custom_call.1} parent=11 // pred_check
        %p392 = pneg %p282
      $region50: #{tpu_custom_call.1} parent=11 // pred_check_branch
        %394 = sbr.rel (%p392) target = $region52
      $region51: #{tpu_custom_call.1} parent=11 // pred_region
        _
      $region52: #{tpu_custom_call.1} parent=11 // pred_fallthru
        _
      // Predicated region
      $region53: #{tpu_custom_call.1} parent=11 // pred_check
        %p395 = pneg %p303
      $region54: #{tpu_custom_call.1} parent=11 // pred_check_branch
        %397 = sbr.rel (%p395) target = $region56
      $region55: #{tpu_custom_call.1} parent=11 // pred_region
        _
      $region56: #{tpu_custom_call.1} parent=11 // pred_fallthru
        _
      // Predicated region
      $region57: #{tpu_custom_call.1} parent=11 // pred_check
        %p398 = pneg %p324
      $region58: #{tpu_custom_call.1} parent=11 // pred_check_branch
        %400 = sbr.rel (%p398) target = $region60
      $region59: #{tpu_custom_call.1} parent=11 // pred_region
        _
      $region60: #{tpu_custom_call.1} parent=11 // pred_fallthru
        _
    $region12: #{tpu_custom_call.1} parent=5 // pred_fallthru
      _
    %p401 = scmp.lt.s32.totalorder %s20, 2
    // Predicated region
    $region61: #{tpu_custom_call.1} parent=5 // pred_check
      %p402 = pneg %p401
    $region62: #{tpu_custom_call.1} parent=5 // pred_check_branch
      %404 = sbr.rel (%p402) target = $region64
    $region63: #{tpu_custom_call.1} parent=5 // pred_region
      // Predicated region
      $region65: #{tpu_custom_call.1} parent=63 // pred_check
        %p405 = pneg %p40
      $region66: #{tpu_custom_call.1} parent=63 // pred_check_branch
        %407 = sbr.rel (%p405) target = $region68
      $region67: #{tpu_custom_call.1} parent=63 // pred_region
        %p408 = scmp.lt.s32.totalorder %s20, 1
        %s409 = scalar_select %p408, %s20, 1
        %s410 = smul.addr %s409, 2
        %s411 = smul.addr %s410, 8
        %s412 = scalar_lea.vmem %s0, %s411
      $region68: #{tpu_custom_call.1} parent=63 // pred_fallthru
        _
      // Predicated region
      $region69: #{tpu_custom_call.1} parent=63 // pred_check
        %p413 = pneg %p66
      $region70: #{tpu_custom_call.1} parent=63 // pred_check_branch
        %415 = sbr.rel (%p413) target = $region72
      $region71: #{tpu_custom_call.1} parent=63 // pred_region
        %p416 = scmp.lt.s32.totalorder %s20, 1
        %s417 = scalar_select %p416, %s20, 1
        %s418 = smul.addr %s417, 96
        %s419 = smul.addr %s418, 8
        %s420 = scalar_lea.vmem %s1, %s419
      $region72: #{tpu_custom_call.1} parent=63 // pred_fallthru
        _
    $region64: #{tpu_custom_call.1} parent=5 // pred_fallthru
      _
    %p421 = scmp.le.s32.totalorder 1, %s20
    %p422 = scmp.lt.s32.totalorder %s20, 3
    %p423 = pnand %p421, %p422
    %p424 = pneg %p423
    // Predicated region
    $region73: #{tpu_custom_call.1} parent=5 // pred_check
      _
    $region74: #{tpu_custom_call.1} parent=5 // pred_check_branch
      %426 = sbr.rel (%p423) target = $region76
    $region75: #{tpu_custom_call.1} parent=5 // pred_region
      %s427 = ssub.s32 %s20, 1
      %p428 = scmp.lt.s32.totalorder %s25, 1
      %s429 = scalar_select %p428, %s25, 1
      %s430 = smul.addr %s429, 2
      %s431 = smul.addr %s430, 8
      %s432 = scalar_lea.vmem %s0, %s431
      %p433 = pneg %p46
      %p434 = pneg %p43
      %p435 = scmp.lt.s32.totalorder %s25, 1
      %s436 = scalar_select %p435, %s25, 1
      %s437 = smul.addr %s436, 96
      %s438 = smul.addr %s437, 8
      %s439 = scalar_lea.vmem %s1, %s438
      %p440 = pneg %p72
      %p441 = pneg %p69
      %p442 = pneg %p93
      %p443 = pneg %p90
      %p444 = pneg %p114
      %p445 = pneg %p111
      %p446 = pneg %p135
      %p447 = pneg %p132
      %p448 = pneg %p156
      %p449 = pneg %p153
      %p450 = pneg %p177
      %p451 = pneg %p174
      %p452 = pneg %p198
      %p453 = pneg %p195
      %p454 = pneg %p219
      %p455 = pneg %p216
      %p456 = pneg %p240
      %p457 = pneg %p237
      %p458 = pneg %p261
      %p459 = pneg %p258
      %p460 = pneg %p282
      %p461 = pneg %p279
      %p462 = pneg %p303
      %p463 = pneg %p300
      %p464 = pneg %p324
      %p465 = pneg %p321
      %p466 = pneg %p350
      %p467 = pneg %p347
      %p468 = scmp.lt.s32.totalorder %s25, 1
      %s469 = scalar_select %p468, %s25, 1
      %s470 = smul.addr %s469, 2
      %s471 = smul.addr %s470, 8
      %s472 = scalar_lea.vmem %s14, %s471
      %p473 = scmp.lt.s32.totalorder %s25, 1
      %s474 = scalar_select %p473, %s25, 1
      %s475 = smul.addr %s474, 2
      %s476 = smul.addr %s475, 8
      %s477 = scalar_lea.vmem %s0, %s476
      %p478 = scmp.lt.s32.totalorder %s25, 1
      %s479 = scalar_select %p478, %s25, 1
      %s480 = smul.addr %s479, 96
      %s481 = smul.addr %s480, 8
      %s482 = scalar_lea.vmem %s1, %s481
      %p483 = scmp.lt.s32.totalorder %s25, 1
      %s484 = scalar_select %p483, %s25, 1
      %s485 = smul.addr %s484, 2
      %s486 = smul.addr %s485, 8
      %s487 = scalar_lea.vmem %s14, %s486
      %v488 = vld [vmem:[%s2] sm:$0xff]
      %v489 = vld [vmem:[%s2 + $0x8] sm:$0xff]
      %v490 = vld [vmem:[%s2 + $0x10] sm:$0xff]
      %v491 = vld [vmem:[%s2 + $0x18] sm:$0xff]
      %v492 = vld [vmem:[%s2 + $0x20] sm:$0xf]
      %v493 = vld [vmem:[%s3] sm:$0x1]
      %v494 = vld [vmem:[%s4] sm:$0xff]
      %v495 = vld [vmem:[%s4 + $0x8] sm:$0xff]
      %v496 = vld [vmem:[%s4 + $0x10] sm:$0xff]
      %v497 = vld [vmem:[%s4 + $0x18] sm:$0xff]
      %v498 = vld [vmem:[%s4 + $0x20] sm:$0xff]
      %v499 = vld [vmem:[%s4 + $0x28] sm:$0xff]
      %v500 = vld [vmem:[%s4 + $0x30] sm:$0xff]
      %v501 = vld [vmem:[%s4 + $0x38] sm:$0xff]
      %v502 = vld [vmem:[%s4 + $0x40] sm:$0xff]
      %v503 = vld [vmem:[%s4 + $0x48] sm:$0xff]
      %v504 = vld [vmem:[%s4 + $0x50] sm:$0xff]
      %v505 = vld [vmem:[%s4 + $0x58] sm:$0xff]
      %v506 = vld [vmem:[%s4 + $0x60] sm:$0xff]
      %v507 = vld [vmem:[%s4 + $0x68] sm:$0xff]
      %v508 = vld [vmem:[%s4 + $0x70] sm:$0xff]
      %v509 = vld [vmem:[%s4 + $0x78] sm:$0xff]
      %v510 = vld [vmem:[%s4 + $0x80] sm:$0xff]
      %v511 = vld [vmem:[%s4 + $0x88] sm:$0xff]
      %v512 = vld [vmem:[%s4 + $0x90] sm:$0xff]
      %v513 = vld [vmem:[%s4 + $0x98] sm:$0xff]
      %v514 = vld [vmem:[%s4 + $0xa0] sm:$0xff]
      %v515 = vld [vmem:[%s4 + $0xa8] sm:$0xff]
      %v516 = vld [vmem:[%s4 + $0xb0] sm:$0xff]
      %v517 = vld [vmem:[%s4 + $0xb8] sm:$0xff]
      %v518 = vld [vmem:[%s5] sm:$0xff]
      %v519 = vld [vmem:[%s5 + $0x8] sm:$0xff]
      %v520 = vld [vmem:[%s5 + $0x10] sm:$0xff]
      %v521 = vld [vmem:[%s5 + $0x18] sm:$0xff]
      %v522 = vld [vmem:[%s6] sm:$0x1]
      %v523 = vld [vmem:[%s7] sm:$0x1]
      %v524 = vld [vmem:[%s8] sm:$0xff]
      %v525 = vld [vmem:[%s8 + $0x8] sm:$0xff]
      %v526 = vld [vmem:[%s8 + $0x10] sm:$0xff]
      %v527 = vld [vmem:[%s8 + $0x18] sm:$0xff]
      %v528 = vld [vmem:[%s9] sm:$0x1]
      %v529 = vld [vmem:[%s10] sm:$0xff]
      %v530 = vld [vmem:[%s10 + $0x8] sm:$0xff]
      %v531 = vld [vmem:[%s10 + $0x10] sm:$0xff]
      %v532 = vld [vmem:[%s10 + $0x18] sm:$0xff]
      %v533 = vld [vmem:[%s11] sm:$0x1]
      %v534 = vld [vmem:[%s12] sm:$0x1]
      %v535 = vld [vmem:[%s13] sm:$0x1]
      %v536 = vld [vmem:[%s477] sm:$0xff]
      %v537 = vld [vmem:[%s477 + $0x8] sm:$0xf]
      %v539 = vlaneseq
      %v540 = vshrl.u32 %v539, 7
      %v541 = vsub.s32 0, %v540
      %v542 = vrot.slane %v493, %v541
      %vm544 = vcmask 293888
      %v546 = vsel %vm544, %v536, 0
      %v549 = vsel %vm544, %v537, 0
      %vm551 = vcmask 1043456
      %v553 = vsel %vm551, %v492, 0
      %555 = vmatprep.subr.mxu0 0.0
      %556 = vmatpush1.msra.mxu0 %v488
      %557 = vmatprep.subr.mxu0 0.0
      %558 = vmatpush1.msra.mxu0 %v489
      %559 = vmatprep.subr.mxu0 0.0
      %560 = vmatpush1.msra.mxu0 %v490
      %561 = vmatprep.subr.mxu0 0.0
      %562 = vmatpush1.msra.mxu0 %v491
      %563 = vmatprep.subr.mxu0 0.0
      %564 = vmatpush1.msra.mxu0 %v553
      %565 = vmatprep.subr.mxu0 0.0
      %566 = vmatpush1.msra.mxu0 0.0
      %567 = vmatprep.subr.mxu0 0.0
      %568 = vmatpush1.msra.mxu0 0.0
      %569 = vmatprep.subr.mxu0 0.0
      %570 = vmatpush1.msra.mxu0 0.0
      %571 = vmatprep.subr.mxu0 0.0
      %572 = vmatpush1.msra.mxu0 0.0
      %573 = vmatprep.subr.mxu0 0.0
      %574 = vmatpush1.msra.mxu0 0.0
      %575 = vmatprep.subr.mxu0 0.0
      %576 = vmatpush1.msra.mxu0 0.0
      %577 = vmatprep.subr.mxu0 0.0
      %578 = vmatpush1.msra.mxu0 0.0
      %579 = vmatprep.subr.mxu0 0.0
      %580 = vmatpush1.msra.mxu0 0.0
      %581 = vmatprep.subr.mxu0 0.0
      %582 = vmatpush1.msra.mxu0 0.0
      %583 = vmatprep.subr.mxu0 0.0
      %584 = vmatpush1.msra.mxu0 0.0
      %585 = vmatprep.subr.mxu0 0.0
      %586 = vmatpush1.msra.mxu0 0.0
      %587 = vmatprep.subr.mxu0 0.0
      %588 = vmatpush1.msra.mxu0 0.0
      %589 = vmatprep.subr.mxu0 0.0
      %590 = vmatpush1.msra.mxu0 0.0
      %591 = vmatprep.subr.mxu0 0.0
      %592 = vmatpush1.msra.mxu0 0.0
      %593 = vmatprep.subr.mxu0 0.0
      %594 = vmatpush1.msra.mxu0 0.0
      %595 = vmatprep.subr.mxu0 0.0
      %596 = vmatpush1.msra.mxu0 0.0
      %597 = vmatprep.subr.mxu0 0.0
      %598 = vmatpush1.msra.mxu0 0.0
      %599 = vmatprep.subr.mxu0 0.0
      %600 = vmatpush1.msra.mxu0 0.0
      %601 = vmatprep.subr.mxu0 0.0
      %602 = vmatpush1.msra.mxu0 0.0
      %603 = vmatprep.subr.mxu0 0.0
      %604 = vmatpush1.msra.mxu0 0.0
      %605 = vmatprep.subr.mxu0 0.0
      %606 = vmatpush1.msra.mxu0 0.0
      %607 = vmatprep.subr.mxu0 0.0
      %608 = vmatpush1.msra.mxu0 0.0
      %609 = vmatprep.subr.mxu0 0.0
      %610 = vmatpush1.msra.mxu0 0.0
      %611 = vmatprep.subr.mxu0 0.0
      %612 = vmatpush1.msra.mxu0 0.0
      %613 = vmatprep.subr.mxu0 0.0
      %614 = vmatpush1.msra.mxu0 0.0
      %615 = vmatprep.subr.mxu0 0.0
      %616 = vmatpush1.msra.mxu0 0.0
      %617 = vmatprep.subr.mxu0 0.0
      %618 = vmatpush1.msra.mxu0 0.0
      %619 = vmatprep.mubr.f32.mxu0 0.0
      %620 = vmatmul.mubr.f32.gmra.mrb[0].mxu0 %v546
      %v621 = vpop.f32.mrb[0].mxu0
      %v622 = vadd.f32 %v542, %v621
      %v623 = vpop.f32.mrb[0].mxu0
      %624 = vmatprep.mubr.f32.mxu0 0.0
      %625 = vmatmul.mubr.f32.gmra.mrb[0].mxu0 %v549
      %v626 = vpop.f32.mrb[0].mxu0
      %v627 = vadd.f32 %v542, %v626
      %v628 = vpop.f32.mrb[0].mxu0
      %629 = vdwg.mxu0
      %v630 = vld [vmem:[%s482] sm:$0xff]
      %v631 = vld [vmem:[%s482 + $0x8] sm:$0xff]
      %v632 = vld [vmem:[%s482 + $0x10] sm:$0xff]
      %v633 = vld [vmem:[%s482 + $0x18] sm:$0xff]
      %v634 = vld [vmem:[%s482 + $0x20] sm:$0xff]
      %v635 = vld [vmem:[%s482 + $0x28] sm:$0xff]
      %v636 = vld [vmem:[%s482 + $0x30] sm:$0xff]
      %v637 = vld [vmem:[%s482 + $0x38] sm:$0xff]
      %v638 = vld [vmem:[%s482 + $0x40] sm:$0xff]
      %v639 = vld [vmem:[%s482 + $0x48] sm:$0xff]
      %v640 = vld [vmem:[%s482 + $0x50] sm:$0xff]
      %v641 = vld [vmem:[%s482 + $0x58] sm:$0xff]
      %v642 = vld [vmem:[%s482 + $0x60] sm:$0xff]
      %v643 = vld [vmem:[%s482 + $0x68] sm:$0xff]
      %v644 = vld [vmem:[%s482 + $0x70] sm:$0xff]
      %v645 = vld [vmem:[%s482 + $0x78] sm:$0xff]
      %v646 = vld [vmem:[%s482 + $0x80] sm:$0xff]
      %v647 = vld [vmem:[%s482 + $0x88] sm:$0xff]
      %v648 = vld [vmem:[%s482 + $0x90] sm:$0xff]
      %v649 = vld [vmem:[%s482 + $0x98] sm:$0xff]
      %v650 = vld [vmem:[%s482 + $0xa0] sm:$0xff]
      %v651 = vld [vmem:[%s482 + $0xa8] sm:$0xff]
      %v652 = vld [vmem:[%s482 + $0xb0] sm:$0xff]
      %v653 = vld [vmem:[%s482 + $0xb8] sm:$0xff]
      %v654 = vld [vmem:[%s482 + $0xc0] sm:$0xff]
      %v655 = vld [vmem:[%s482 + $0xc8] sm:$0xff]
      %v656 = vld [vmem:[%s482 + $0xd0] sm:$0xff]
      %v657 = vld [vmem:[%s482 + $0xd8] sm:$0xff]
      %v658 = vld [vmem:[%s482 + $0xe0] sm:$0xff]
      %v659 = vld [vmem:[%s482 + $0xe8] sm:$0xff]
      %v660 = vld [vmem:[%s482 + $0xf0] sm:$0xff]
      %v661 = vld [vmem:[%s482 + $0xf8] sm:$0xff]
      %v662 = vld [vmem:[%s482 + $0x100] sm:$0xff]
      %v663 = vld [vmem:[%s482 + $0x108] sm:$0xff]
      %v664 = vld [vmem:[%s482 + $0x110] sm:$0xff]
      %v665 = vld [vmem:[%s482 + $0x118] sm:$0xff]
      %v666 = vld [vmem:[%s482 + $0x120] sm:$0xff]
      %v667 = vld [vmem:[%s482 + $0x128] sm:$0xff]
      %v668 = vld [vmem:[%s482 + $0x130] sm:$0xff]
      %v669 = vld [vmem:[%s482 + $0x138] sm:$0xff]
      %v670 = vld [vmem:[%s482 + $0x140] sm:$0xff]
      %v671 = vld [vmem:[%s482 + $0x148] sm:$0xff]
      %v672 = vld [vmem:[%s482 + $0x150] sm:$0xff]
      %v673 = vld [vmem:[%s482 + $0x158] sm:$0xff]
      %v674 = vld [vmem:[%s482 + $0x160] sm:$0xff]
      %v675 = vld [vmem:[%s482 + $0x168] sm:$0xff]
      %v676 = vld [vmem:[%s482 + $0x170] sm:$0xff]
      %v677 = vld [vmem:[%s482 + $0x178] sm:$0xff]
      %v678 = vld [vmem:[%s482 + $0x180] sm:$0xff]
      %v679 = vld [vmem:[%s482 + $0x188] sm:$0xff]
      %v680 = vld [vmem:[%s482 + $0x190] sm:$0xff]
      %v681 = vld [vmem:[%s482 + $0x198] sm:$0xff]
      %v682 = vld [vmem:[%s482 + $0x1a0] sm:$0xff]
      %v683 = vld [vmem:[%s482 + $0x1a8] sm:$0xff]
      %v684 = vld [vmem:[%s482 + $0x1b0] sm:$0xff]
      %v685 = vld [vmem:[%s482 + $0x1b8] sm:$0xff]
      %v686 = vld [vmem:[%s482 + $0x1c0] sm:$0xff]
      %v687 = vld [vmem:[%s482 + $0x1c8] sm:$0xff]
      %v688 = vld [vmem:[%s482 + $0x1d0] sm:$0xff]
      %v689 = vld [vmem:[%s482 + $0x1d8] sm:$0xff]
      %v690 = vld [vmem:[%s482 + $0x1e0] sm:$0xff]
      %v691 = vld [vmem:[%s482 + $0x1e8] sm:$0xff]
      %v692 = vld [vmem:[%s482 + $0x1f0] sm:$0xff]
      %v693 = vld [vmem:[%s482 + $0x1f8] sm:$0xff]
      %v694 = vld [vmem:[%s482 + $0x200] sm:$0xff]
      %v695 = vld [vmem:[%s482 + $0x208] sm:$0xff]
      %v696 = vld [vmem:[%s482 + $0x210] sm:$0xff]
      %v697 = vld [vmem:[%s482 + $0x218] sm:$0xff]
      %v698 = vld [vmem:[%s482 + $0x220] sm:$0xff]
      %v699 = vld [vmem:[%s482 + $0x228] sm:$0xff]
      %v700 = vld [vmem:[%s482 + $0x230] sm:$0xff]
      %v701 = vld [vmem:[%s482 + $0x238] sm:$0xff]
      %v702 = vld [vmem:[%s482 + $0x240] sm:$0xff]
      %v703 = vld [vmem:[%s482 + $0x248] sm:$0xff]
      %v704 = vld [vmem:[%s482 + $0x250] sm:$0xff]
      %v705 = vld [vmem:[%s482 + $0x258] sm:$0xff]
      %v706 = vld [vmem:[%s482 + $0x260] sm:$0xff]
      %v707 = vld [vmem:[%s482 + $0x268] sm:$0xff]
      %v708 = vld [vmem:[%s482 + $0x270] sm:$0xff]
      %v709 = vld [vmem:[%s482 + $0x278] sm:$0xff]
      %v710 = vld [vmem:[%s482 + $0x280] sm:$0xff]
      %v711 = vld [vmem:[%s482 + $0x288] sm:$0xff]
      %v712 = vld [vmem:[%s482 + $0x290] sm:$0xff]
      %v713 = vld [vmem:[%s482 + $0x298] sm:$0xff]
      %v714 = vld [vmem:[%s482 + $0x2a0] sm:$0xff]
      %v715 = vld [vmem:[%s482 + $0x2a8] sm:$0xff]
      %v716 = vld [vmem:[%s482 + $0x2b0] sm:$0xff]
      %v717 = vld [vmem:[%s482 + $0x2b8] sm:$0xff]
      %v718 = vld [vmem:[%s482 + $0x2c0] sm:$0xff]
      %v719 = vld [vmem:[%s482 + $0x2c8] sm:$0xff]
      %v720 = vld [vmem:[%s482 + $0x2d0] sm:$0xff]
      %v721 = vld [vmem:[%s482 + $0x2d8] sm:$0xff]
      %v722 = vld [vmem:[%s482 + $0x2e0] sm:$0xff]
      %v723 = vld [vmem:[%s482 + $0x2e8] sm:$0xff]
      %v724 = vld [vmem:[%s482 + $0x2f0] sm:$0xff]
      %v725 = vld [vmem:[%s482 + $0x2f8] sm:$0xff]
      %727 = vset.pattern.permute.xlu0 0
      %728 = vperm.xlu0 %727, %v518
      %v729 = vpop.permute.xlu0 %728
      %732 = vset.pattern.permute.xlu0 0
      %733 = vperm.xlu0 %732, %v519
      %v734 = vpop.permute.xlu0 %733
      %737 = vset.pattern.permute.xlu0 0
      %738 = vperm.xlu0 %737, %v520
      %v739 = vpop.permute.xlu0 %738
      %742 = vset.pattern.permute.xlu0 0
      %743 = vperm.xlu0 %742, %v521
      %v744 = vpop.permute.xlu0 %743
      %746 = vmatprep.subr.mxu0 0.0
      %747 = vmatpush1.msra.mxu0 %v630
      %748 = vmatprep.subr.mxu0 0.0
      %749 = vmatpush1.msra.mxu0 %v631
      %750 = vmatprep.subr.mxu0 0.0
      %751 = vmatpush1.msra.mxu0 %v632
      %752 = vmatprep.subr.mxu0 0.0
      %753 = vmatpush1.msra.mxu0 %v633
      %754 = vmatprep.subr.mxu0 0.0
      %755 = vmatpush1.msra.mxu0 %v634
      %756 = vmatprep.subr.mxu0 0.0
      %757 = vmatpush1.msra.mxu0 %v635
      %758 = vmatprep.subr.mxu0 0.0
      %759 = vmatpush1.msra.mxu0 %v636
      %760 = vmatprep.subr.mxu0 0.0
      %761 = vmatpush1.msra.mxu0 %v637
      %762 = vmatprep.subr.mxu0 0.0
      %763 = vmatpush1.msra.mxu0 %v638
      %764 = vmatprep.subr.mxu0 0.0
      %765 = vmatpush1.msra.mxu0 %v639
      %766 = vmatprep.subr.mxu0 0.0
      %767 = vmatpush1.msra.mxu0 %v640
      %768 = vmatprep.subr.mxu0 0.0
      %769 = vmatpush1.msra.mxu0 %v641
      %770 = vmatprep.subr.mxu0 0.0
      %771 = vmatpush1.msra.mxu0 %v642
      %772 = vmatprep.subr.mxu0 0.0
      %773 = vmatpush1.msra.mxu0 %v643
      %774 = vmatprep.subr.mxu0 0.0
      %775 = vmatpush1.msra.mxu0 %v644
      %776 = vmatprep.subr.mxu0 0.0
      %777 = vmatpush1.msra.mxu0 %v645
      %778 = vmatprep.subr.mxu0 0.0
      %779 = vmatpush1.msra.mxu0 %v646
      %780 = vmatprep.subr.mxu0 0.0
      %781 = vmatpush1.msra.mxu0 %v647
      %782 = vmatprep.subr.mxu0 0.0
      %783 = vmatpush1.msra.mxu0 %v648
      %784 = vmatprep.subr.mxu0 0.0
      %785 = vmatpush1.msra.mxu0 %v649
      %786 = vmatprep.subr.mxu0 0.0
      %787 = vmatpush1.msra.mxu0 %v650
      %788 = vmatprep.subr.mxu0 0.0
      %789 = vmatpush1.msra.mxu0 %v651
      %790 = vmatprep.subr.mxu0 0.0
      %791 = vmatpush1.msra.mxu0 %v652
      %792 = vmatprep.subr.mxu0 0.0
      %793 = vmatpush1.msra.mxu0 %v653
      %794 = vmatprep.subr.mxu0 0.0
      %795 = vmatpush1.msra.mxu0 %v654
      %796 = vmatprep.subr.mxu0 0.0
      %797 = vmatpush1.msra.mxu0 %v655
      %798 = vmatprep.subr.mxu0 0.0
      %799 = vmatpush1.msra.mxu0 %v656
      %800 = vmatprep.subr.mxu0 0.0
      %801 = vmatpush1.msra.mxu0 %v657
      %802 = vmatprep.subr.mxu0 0.0
      %803 = vmatpush1.msra.mxu0 %v658
      %804 = vmatprep.subr.mxu0 0.0
      %805 = vmatpush1.msra.mxu0 %v659
      %806 = vmatprep.subr.mxu0 0.0
      %807 = vmatpush1.msra.mxu0 %v660
      %808 = vmatprep.subr.mxu0 0.0
      %809 = vmatpush1.msra.mxu0 %v661
      %810 = vmatprep.mubr.f32.mxu0 %v495
      %811 = vmatmul.mubr.f32.gmra.mrb[0].mxu0 %v494
      %v812 = vpop.f32.mrb[0].mxu0
      %v813 = vadd.f32 %v729, %v812
      %v814 = vpop.f32.mrb[0].mxu0
      %815 = vmatprep.mubr.f32.mxu0 %v501
      %816 = vmatmul.mubr.f32.gmra.mrb[0].mxu0 %v500
      %v817 = vpop.f32.mrb[0].mxu0
      %v818 = vadd.f32 %v734, %v817
      %v819 = vpop.f32.mrb[0].mxu0
      %820 = vmatprep.mubr.f32.mxu0 %v507
      %821 = vmatmul.mubr.f32.gmra.mrb[0].mxu0 %v506
      %v822 = vpop.f32.mrb[0].mxu0
      %v823 = vadd.f32 %v739, %v822
      %v824 = vpop.f32.mrb[0].mxu0
      %825 = vmatprep.mubr.f32.mxu0 %v513
      %826 = vmatmul.mubr.f32.gmra.mrb[0].mxu0 %v512
      %v827 = vpop.f32.mrb[0].mxu0
      %v828 = vadd.f32 %v744, %v827
      %v829 = vpop.f32.mrb[0].mxu0
      %830 = vdwg.mxu0
      %831 = vmatprep.subr.mxu0 0.0
      %832 = vmatpush1.msra.mxu0 %v662
      %833 = vmatprep.subr.mxu0 0.0
      %834 = vmatpush1.msra.mxu0 %v663
      %835 = vmatprep.subr.mxu0 0.0
      %836 = vmatpush1.msra.mxu0 %v664
      %837 = vmatprep.subr.mxu0 0.0
      %838 = vmatpush1.msra.mxu0 %v665
      %839 = vmatprep.subr.mxu0 0.0
      %840 = vmatpush1.msra.mxu0 %v666
      %841 = vmatprep.subr.mxu0 0.0
      %842 = vmatpush1.msra.mxu0 %v667
      %843 = vmatprep.subr.mxu0 0.0
      %844 = vmatpush1.msra.mxu0 %v668
      %845 = vmatprep.subr.mxu0 0.0
      %846 = vmatpush1.msra.mxu0 %v669
      %847 = vmatprep.subr.mxu0 0.0
      %848 = vmatpush1.msra.mxu0 %v670
      %849 = vmatprep.subr.mxu0 0.0
      %850 = vmatpush1.msra.mxu0 %v671
      %851 = vmatprep.subr.mxu0 0.0
      %852 = vmatpush1.msra.mxu0 %v672
      %853 = vmatprep.subr.mxu0 0.0
      %854 = vmatpush1.msra.mxu0 %v673
      %855 = vmatprep.subr.mxu0 0.0
      %856 = vmatpush1.msra.mxu0 %v674
      %857 = vmatprep.subr.mxu0 0.0
      %858 = vmatpush1.msra.mxu0 %v675
      %859 = vmatprep.subr.mxu0 0.0
      %860 = vmatpush1.msra.mxu0 %v676
      %861 = vmatprep.subr.mxu0 0.0
      %862 = vmatpush1.msra.mxu0 %v677
      %863 = vmatprep.subr.mxu0 0.0
      %864 = vmatpush1.msra.mxu0 %v678
      %865 = vmatprep.subr.mxu0 0.0
      %866 = vmatpush1.msra.mxu0 %v679
      %867 = vmatprep.subr.mxu0 0.0
      %868 = vmatpush1.msra.mxu0 %v680
      %869 = vmatprep.subr.mxu0 0.0
      %870 = vmatpush1.msra.mxu0 %v681
      %871 = vmatprep.subr.mxu0 0.0
      %872 = vmatpush1.msra.mxu0 %v682
      %873 = vmatprep.subr.mxu0 0.0
      %874 = vmatpush1.msra.mxu0 %v683
      %875 = vmatprep.subr.mxu0 0.0
      %876 = vmatpush1.msra.mxu0 %v684
      %877 = vmatprep.subr.mxu0 0.0
      %878 = vmatpush1.msra.mxu0 %v685
      %879 = vmatprep.subr.mxu0 0.0
      %880 = vmatpush1.msra.mxu0 %v686
      %881 = vmatprep.subr.mxu0 0.0
      %882 = vmatpush1.msra.mxu0 %v687
      %883 = vmatprep.subr.mxu0 0.0
      %884 = vmatpush1.msra.mxu0 %v688
      %885 = vmatprep.subr.mxu0 0.0
      %886 = vmatpush1.msra.mxu0 %v689
      %887 = vmatprep.subr.mxu0 0.0
      %888 = vmatpush1.msra.mxu0 %v690
      %889 = vmatprep.subr.mxu0 0.0
      %890 = vmatpush1.msra.mxu0 %v691
      %891 = vmatprep.subr.mxu0 0.0
      %892 = vmatpush1.msra.mxu0 %v692
      %893 = vmatprep.subr.mxu0 0.0
      %894 = vmatpush1.msra.mxu0 %v693
      %895 = vmatprep.mubr.f32.mxu0 %v497
      %896 = vmatmul.mubr.f32.gmra.mrb[0].mxu0 %v496
      %v897 = vpop.f32.mrb[0].mxu0
      %v898 = vadd.f32 %v813, %v897
      %v899 = vpop.f32.mrb[0].mxu0
      %900 = vmatprep.mubr.f32.mxu0 %v503
      %901 = vmatmul.mubr.f32.gmra.mrb[0].mxu0 %v502
      %v902 = vpop.f32.mrb[0].mxu0
      %v903 = vadd.f32 %v818, %v902
      %v904 = vpop.f32.mrb[0].mxu0
      %905 = vmatprep.mubr.f32.mxu0 %v509
      %906 = vmatmul.mubr.f32.gmra.mrb[0].mxu0 %v508
      %v907 = vpop.f32.mrb[0].mxu0
      %v908 = vadd.f32 %v823, %v907
      %v909 = vpop.f32.mrb[0].mxu0
      %910 = vmatprep.mubr.f32.mxu0 %v515
      %911 = vmatmul.mubr.f32.gmra.mrb[0].mxu0 %v514
      %v912 = vpop.f32.mrb[0].mxu0
      %v913 = vadd.f32 %v828, %v912
      %v914 = vpop.f32.mrb[0].mxu0
      %915 = vdwg.mxu0
      %916 = vmatprep.subr.mxu0 0.0
      %917 = vmatpush1.msra.mxu0 %v694
      %918 = vmatprep.subr.mxu0 0.0
      %919 = vmatpush1.msra.mxu0 %v695
      %920 = vmatprep.subr.mxu0 0.0
      %921 = vmatpush1.msra.mxu0 %v696
      %922 = vmatprep.subr.mxu0 0.0
      %923 = vmatpush1.msra.mxu0 %v697
      %924 = vmatprep.subr.mxu0 0.0
      %925 = vmatpush1.msra.mxu0 %v698
      %926 = vmatprep.subr.mxu0 0.0
      %927 = vmatpush1.msra.mxu0 %v699
      %928 = vmatprep.subr.mxu0 0.0
      %929 = vmatpush1.msra.mxu0 %v700
      %930 = vmatprep.subr.mxu0 0.0
      %931 = vmatpush1.msra.mxu0 %v701
      %932 = vmatprep.subr.mxu0 0.0
      %933 = vmatpush1.msra.mxu0 %v702
      %934 = vmatprep.subr.mxu0 0.0
      %935 = vmatpush1.msra.mxu0 %v703
      %936 = vmatprep.subr.mxu0 0.0
      %937 = vmatpush1.msra.mxu0 %v704
      %938 = vmatprep.subr.mxu0 0.0
      %939 = vmatpush1.msra.mxu0 %v705
      %940 = vmatprep.subr.mxu0 0.0
      %941 = vmatpush1.msra.mxu0 %v706
      %942 = vmatprep.subr.mxu0 0.0
      %943 = vmatpush1.msra.mxu0 %v707
      %944 = vmatprep.subr.mxu0 0.0
      %945 = vmatpush1.msra.mxu0 %v708
      %946 = vmatprep.subr.mxu0 0.0
      %947 = vmatpush1.msra.mxu0 %v709
      %948 = vmatprep.subr.mxu0 0.0
      %949 = vmatpush1.msra.mxu0 %v710
      %950 = vmatprep.subr.mxu0 0.0
      %951 = vmatpush1.msra.mxu0 %v711
      %952 = vmatprep.subr.mxu0 0.0
      %953 = vmatpush1.msra.mxu0 %v712
      %954 = vmatprep.subr.mxu0 0.0
      %955 = vmatpush1.msra.mxu0 %v713
      %956 = vmatprep.subr.mxu0 0.0
      %957 = vmatpush1.msra.mxu0 %v714
      %958 = vmatprep.subr.mxu0 0.0
      %959 = vmatpush1.msra.mxu0 %v715
      %960 = vmatprep.subr.mxu0 0.0
      %961 = vmatpush1.msra.mxu0 %v716
      %962 = vmatprep.subr.mxu0 0.0
      %963 = vmatpush1.msra.mxu0 %v717
      %964 = vmatprep.subr.mxu0 0.0
      %965 = vmatpush1.msra.mxu0 %v718
      %966 = vmatprep.subr.mxu0 0.0
      %967 = vmatpush1.msra.mxu0 %v719
      %968 = vmatprep.subr.mxu0 0.0
      %969 = vmatpush1.msra.mxu0 %v720
      %970 = vmatprep.subr.mxu0 0.0
      %971 = vmatpush1.msra.mxu0 %v721
      %972 = vmatprep.subr.mxu0 0.0
      %973 = vmatpush1.msra.mxu0 %v722
      %974 = vmatprep.subr.mxu0 0.0
      %975 = vmatpush1.msra.mxu0 %v723
      %976 = vmatprep.subr.mxu0 0.0
      %977 = vmatpush1.msra.mxu0 %v724
      %978 = vmatprep.subr.mxu0 0.0
      %979 = vmatpush1.msra.mxu0 %v725
      %980 = vmatprep.mubr.f32.mxu0 %v499
      %981 = vmatmul.mubr.f32.gmra.mrb[0].mxu0 %v498
      %v982 = vpop.f32.mrb[0].mxu0
      %v983 = vadd.f32 %v898, %v982
      %v984 = vpop.f32.mrb[0].mxu0
      %985 = vmatprep.mubr.f32.mxu0 %v505
      %986 = vmatmul.mubr.f32.gmra.mrb[0].mxu0 %v504
      %v987 = vpop.f32.mrb[0].mxu0
      %v988 = vadd.f32 %v903, %v987
      %v989 = vpop.f32.mrb[0].mxu0
      %990 = vmatprep.mubr.f32.mxu0 %v511
      %991 = vmatmul.mubr.f32.gmra.mrb[0].mxu0 %v510
      %v992 = vpop.f32.mrb[0].mxu0
      %v993 = vadd.f32 %v908, %v992
      %v994 = vpop.f32.mrb[0].mxu0
      %995 = vmatprep.mubr.f32.mxu0 %v517
      %996 = vmatmul.mubr.f32.gmra.mrb[0].mxu0 %v516
      %v997 = vpop.f32.mrb[0].mxu0
      %v998 = vadd.f32 %v913, %v997
      %v999 = vpop.f32.mrb[0].mxu0
      %1000 = vdwg.mxu0
      %vm1001 = vcmask 261120
      %v1003 = vsel %vm1001, %v622, 0
      %v1006 = vsel %vm1001, %v627, 0
      %1008 = vmatprep.subr.mxu0 0.0
      %1009 = vmatpush1.msra.mxu0 %v983
      %1010 = vmatprep.subr.mxu0 0.0
      %1011 = vmatpush1.msra.mxu0 %v988
      %1012 = vmatprep.subr.mxu0 0.0
      %1013 = vmatpush1.msra.mxu0 %v993
      %1014 = vmatprep.subr.mxu0 0.0
      %1015 = vmatpush1.msra.mxu0 %v998
      %1016 = vmatprep.subr.mxu0 0.0
      %1017 = vmatpush1.msra.mxu0 0.0
      %1018 = vmatprep.subr.mxu0 0.0
      %1019 = vmatpush1.msra.mxu0 0.0
      %1020 = vmatprep.subr.mxu0 0.0
      %1021 = vmatpush1.msra.mxu0 0.0
      %1022 = vmatprep.subr.mxu0 0.0
      %1023 = vmatpush1.msra.mxu0 0.0
      %1024 = vmatprep.subr.mxu0 0.0
      %1025 = vmatpush1.msra.mxu0 0.0
      %1026 = vmatprep.subr.mxu0 0.0
      %1027 = vmatpush1.msra.mxu0 0.0
      %1028 = vmatprep.subr.mxu0 0.0
      %1029 = vmatpush1.msra.mxu0 0.0
      %1030 = vmatprep.subr.mxu0 0.0
      %1031 = vmatpush1.msra.mxu0 0.0
      %1032 = vmatprep.subr.mxu0 0.0
      %1033 = vmatpush1.msra.mxu0 0.0
      %1034 = vmatprep.subr.mxu0 0.0
      %1035 = vmatpush1.msra.mxu0 0.0
      %1036 = vmatprep.subr.mxu0 0.0
      %1037 = vmatpush1.msra.mxu0 0.0
      %1038 = vmatprep.subr.mxu0 0.0
      %1039 = vmatpush1.msra.mxu0 0.0
      %1040 = vmatprep.subr.mxu0 0.0
      %1041 = vmatpush1.msra.mxu0 0.0
      %1042 = vmatprep.subr.mxu0 0.0
      %1043 = vmatpush1.msra.mxu0 0.0
      %1044 = vmatprep.subr.mxu0 0.0
      %1045 = vmatpush1.msra.mxu0 0.0
      %1046 = vmatprep.subr.mxu0 0.0
      %1047 = vmatpush1.msra.mxu0 0.0
      %1048 = vmatprep.subr.mxu0 0.0
      %1049 = vmatpush1.msra.mxu0 0.0
      %1050 = vmatprep.subr.mxu0 0.0
      %1051 = vmatpush1.msra.mxu0 0.0
      %1052 = vmatprep.subr.mxu0 0.0
      %1053 = vmatpush1.msra.mxu0 0.0
      %1054 = vmatprep.subr.mxu0 0.0
      %1055 = vmatpush1.msra.mxu0 0.0
      %1056 = vmatprep.subr.mxu0 0.0
      %1057 = vmatpush1.msra.mxu0 0.0
      %1058 = vmatprep.subr.mxu0 0.0
      %1059 = vmatpush1.msra.mxu0 0.0
      %1060 = vmatprep.subr.mxu0 0.0
      %1061 = vmatpush1.msra.mxu0 0.0
      %1062 = vmatprep.subr.mxu0 0.0
      %1063 = vmatpush1.msra.mxu0 0.0
      %1064 = vmatprep.subr.mxu0 0.0
      %1065 = vmatpush1.msra.mxu0 0.0
      %1066 = vmatprep.subr.mxu0 0.0
      %1067 = vmatpush1.msra.mxu0 0.0
      %1068 = vmatprep.subr.mxu0 0.0
      %1069 = vmatpush1.msra.mxu0 0.0
      %1070 = vmatprep.subr.mxu0 0.0
      %1071 = vmatpush1.msra.mxu0 0.0
      %1072 = vmatprep.mubr.f32.mxu0 0.0
      %1073 = vmatmul.mubr.f32.gmra.mrb[0].mxu0 %v1003
      %v1074 = vpop.f32.mrb[0].mxu0
      %v1075 = vadd.f32 0.0, %v1074
      %v1076 = vpop.f32.mrb[0].mxu0
      %1077 = vmatprep.mubr.f32.mxu0 0.0
      %1078 = vmatmul.mubr.f32.gmra.mrb[0].mxu0 %v1006
      %v1079 = vpop.f32.mrb[0].mxu0
      %v1080 = vadd.f32 0.0, %v1079
      %v1081 = vpop.f32.mrb[0].mxu0
      %1082 = vdwg.mxu0
      %vm1083 = vcmask 130048
      %v1084 = vsel %vm1083, %v1075, -inf
      %1085 = vmax.xlane.f32.xlu0 %v1084
      %v1086 = vpop.xlane.xlu0 %1085
      %vm1087 = vcmask 125952
      %v1088 = vsel %vm1087, %v1080, -inf
      %1089 = vmax.xlane.f32.xlu0 %v1088
      %v1090 = vpop.xlane.xlu0 %1089
      %v1091 = vsub.f32 %v1075, %v1086
      %v1092 = vsub.f32 %v1080, %v1090
      %v1093 = vmul.f32 %v1091, 1.442695
      %v1094 = vpow.pop %v1093
      %v1095 = vmul.f32 %v1092, 1.442695
      %v1096 = vpow.pop %v1095
      %v1097 = vsel %vm1083, %v1094, 0.0
      %1098 = vadd.xlane.f32.xlu0 %v1097
      %v1099 = vpop.xlane.xlu0 %1098
      %v1100 = vsel %vm1087, %v1096, 0.0
      %1101 = vadd.xlane.f32.xlu0 %v1100
      %v1102 = vpop.xlane.xlu0 %1101
      %v1103 = vrcp.pop %v1099
      %v1104 = vmul.f32 %v1094, %v1103
      %v1105 = vrcp.pop %v1102
      %v1106 = vmul.f32 %v1096, %v1105
      %v1108 = vsel %vm1083, %v1104, 0
      %v1111 = vsel %vm1083, %v1106, 0
      %v1114 = vsel %vm1083, %v983, 0
      %v1117 = vsel %vm1083, %v988, 0
      %v1120 = vsel %vm1083, %v993, 0
      %v1123 = vsel %vm1083, %v998, 0
      %1125 = vmatprep.subr.mxu0 0.0
      %1126 = vmatpush1.xpose.msra.mxu0 %v1114
      %1127 = vmatprep.subr.mxu0 0.0
      %1128 = vmatpush1.xpose.msra.mxu0 %v1117
      %1129 = vmatprep.subr.mxu0 0.0
      %1130 = vmatpush1.xpose.msra.mxu0 %v1120
      %1131 = vmatprep.subr.mxu0 0.0
      %1132 = vmatpush1.xpose.msra.mxu0 %v1123
      %1133 = vmatprep.subr.mxu0 0.0
      %1134 = vmatpush1.xpose.msra.mxu0 0.0
      %1135 = vmatprep.subr.mxu0 0.0
      %1136 = vmatpush1.xpose.msra.mxu0 0.0
      %1137 = vmatprep.subr.mxu0 0.0
      %1138 = vmatpush1.xpose.msra.mxu0 0.0
      %1139 = vmatprep.subr.mxu0 0.0
      %1140 = vmatpush1.xpose.msra.mxu0 0.0
      %1141 = vmatprep.subr.mxu0 0.0
      %1142 = vmatpush1.xpose.msra.mxu0 0.0
      %1143 = vmatprep.subr.mxu0 0.0
      %1144 = vmatpush1.xpose.msra.mxu0 0.0
      %1145 = vmatprep.subr.mxu0 0.0
      %1146 = vmatpush1.xpose.msra.mxu0 0.0
      %1147 = vmatprep.subr.mxu0 0.0
      %1148 = vmatpush1.xpose.msra.mxu0 0.0
      %1149 = vmatprep.subr.mxu0 0.0
      %1150 = vmatpush1.xpose.msra.mxu0 0.0
      %1151 = vmatprep.subr.mxu0 0.0
      %1152 = vmatpush1.xpose.msra.mxu0 0.0
      %1153 = vmatprep.subr.mxu0 0.0
      %1154 = vmatpush1.xpose.msra.mxu0 0.0
      %1155 = vmatprep.subr.mxu0 0.0
      %1156 = vmatpush1.xpose.msra.mxu0 0.0
      %1157 = vmatprep.subr.mxu0 0.0
      %1158 = vmatpush1.xpose.msra.mxu0 0.0
      %1159 = vmatprep.subr.mxu0 0.0
      %1160 = vmatpush1.xpose.msra.mxu0 0.0
      %1161 = vmatprep.subr.mxu0 0.0
      %1162 = vmatpush1.xpose.msra.mxu0 0.0
      %1163 = vmatprep.subr.mxu0 0.0
      %1164 = vmatpush1.xpose.msra.mxu0 0.0
      %1165 = vmatprep.subr.mxu0 0.0
      %1166 = vmatpush1.xpose.msra.mxu0 0.0
      %1167 = vmatprep.subr.mxu0 0.0
      %1168 = vmatpush1.xpose.msra.mxu0 0.0
      %1169 = vmatprep.subr.mxu0 0.0
      %1170 = vmatpush1.xpose.msra.mxu0 0.0
      %1171 = vmatprep.subr.mxu0 0.0
      %1172 = vmatpush1.xpose.msra.mxu0 0.0
      %1173 = vmatprep.subr.mxu0 0.0
      %1174 = vmatpush1.xpose.msra.mxu0 0.0
      %1175 = vmatprep.subr.mxu0 0.0
      %1176 = vmatpush1.xpose.msra.mxu0 0.0
      %1177 = vmatprep.subr.mxu0 0.0
      %1178 = vmatpush1.xpose.msra.mxu0 0.0
      %1179 = vmatprep.subr.mxu0 0.0
      %1180 = vmatpush1.xpose.msra.mxu0 0.0
      %1181 = vmatprep.subr.mxu0 0.0
      %1182 = vmatpush1.xpose.msra.mxu0 0.0
      %1183 = vmatprep.subr.mxu0 0.0
      %1184 = vmatpush1.xpose.msra.mxu0 0.0
      %1185 = vmatprep.subr.mxu0 0.0
      %1186 = vmatpush1.xpose.msra.mxu0 0.0
      %1187 = vmatprep.subr.mxu0 0.0
      %1188 = vmatpush1.xpose.msra.mxu0 0.0
      %1189 = vmatprep.mubr.f32.mxu0 0.0
      %1190 = vmatmul.mubr.f32.gmra.mrb[0].mxu0 %v1108
      %v1191 = vpop.f32.mrb[0].mxu0
      %v1192 = vadd.f32 %v622, %v1191
      %v1193 = vpop.f32.mrb[0].mxu0
      %1194 = vmatprep.mubr.f32.mxu0 0.0
      %1195 = vmatmul.mubr.f32.gmra.mrb[0].mxu0 %v1111
      %v1196 = vpop.f32.mrb[0].mxu0
      %v1197 = vadd.f32 %v627, %v1196
      %v1198 = vpop.f32.mrb[0].mxu0
      %1199 = vdwg.mxu0
      %v1200 = vsel %vm1001, %v1192, 0.0
      %1201 = vadd.xlane.f32.xlu0 %v1200
      %v1202 = vpop.xlane.xlu0 %1201
      %vm1203 = vcmask 257024
      %v1204 = vsel %vm1203, %v1197, 0.0
      %1205 = vadd.xlane.f32.xlu0 %v1204
      %v1206 = vpop.xlane.xlu0 %1205
      %v1207 = vrcp.pop 32.0
      %v1208 = vmul.f32 %v1202, %v1207
      %v1209 = vmul.f32 %v1206, %v1207
      %v1210 = vsub.f32 %v1192, %v1208
      %v1211 = vsub.f32 %v1197, %v1209
      %v1212 = vmul.f32 %v1210, %v1210
      %v1213 = vmul.f32 %v1211, %v1211
      %v1214 = vsel %vm1001, %v1212, 0.0
      %1215 = vadd.xlane.f32.xlu0 %v1214
      %v1216 = vpop.xlane.xlu0 %1215
      %v1217 = vsel %vm1203, %v1213, 0.0
      %1218 = vadd.xlane.f32.xlu0 %v1217
      %v1219 = vpop.xlane.xlu0 %1218
      %v1220 = vmul.f32 %v1216, %v1207
      %v1221 = vmul.f32 %v1219, %v1207
      %v1222 = vadd.f32 %v1220, 1e-05
      %v1223 = vadd.f32 %v1221, 1e-05
      %v1224 = vrsqrt.pop %v1222
      %v1225 = vrsqrt.pop %v1223
      %v1226 = vmul.f32 %v1210, %v1224
      %v1227 = vmul.f32 %v1211, %v1225
      %v1229 = vlaneseq
      %v1230 = vshrl.u32 %v1229, 7
      %v1231 = vsub.s32 0, %v1230
      %v1232 = vrot.slane %v522, %v1231
      %v1234 = vmul.f32 %v1226, %v1232
      %v1235 = vmul.f32 %v1227, %v1232
      %v1237 = vlaneseq
      %v1238 = vshrl.u32 %v1237, 7
      %v1239 = vsub.s32 0, %v1238
      %v1240 = vrot.slane %v523, %v1239
      %v1242 = vadd.f32 %v1234, %v1240
      %v1243 = vadd.f32 %v1235, %v1240
      %v1245 = vlaneseq
      %v1246 = vshrl.u32 %v1245, 7
      %v1247 = vsub.s32 0, %v1246
      %v1248 = vrot.slane %v528, %v1247
      %v1251 = vsel %vm1001, %v1242, 0
      %v1254 = vsel %vm1001, %v1243, 0
      %1256 = vmatprep.subr.mxu0 0.0
      %1257 = vmatpush1.msra.mxu0 %v524
      %1258 = vmatprep.subr.mxu0 0.0
      %1259 = vmatpush1.msra.mxu0 %v525
      %1260 = vmatprep.subr.mxu0 0.0
      %1261 = vmatpush1.msra.mxu0 %v526
      %1262 = vmatprep.subr.mxu0 0.0
      %1263 = vmatpush1.msra.mxu0 %v527
      %1264 = vmatprep.subr.mxu0 0.0
      %1265 = vmatpush1.msra.mxu0 0.0
      %1266 = vmatprep.subr.mxu0 0.0
      %1267 = vmatpush1.msra.mxu0 0.0
      %1268 = vmatprep.subr.mxu0 0.0
      %1269 = vmatpush1.msra.mxu0 0.0
      %1270 = vmatprep.subr.mxu0 0.0
      %1271 = vmatpush1.msra.mxu0 0.0
      %1272 = vmatprep.subr.mxu0 0.0
      %1273 = vmatpush1.msra.mxu0 0.0
      %1274 = vmatprep.subr.mxu0 0.0
      %1275 = vmatpush1.msra.mxu0 0.0
      %1276 = vmatprep.subr.mxu0 0.0
      %1277 = vmatpush1.msra.mxu0 0.0
      %1278 = vmatprep.subr.mxu0 0.0
      %1279 = vmatpush1.msra.mxu0 0.0
      %1280 = vmatprep.subr.mxu0 0.0
      %1281 = vmatpush1.msra.mxu0 0.0
      %1282 = vmatprep.subr.mxu0 0.0
      %1283 = vmatpush1.msra.mxu0 0.0
      %1284 = vmatprep.subr.mxu0 0.0
      %1285 = vmatpush1.msra.mxu0 0.0
      %1286 = vmatprep.subr.mxu0 0.0
      %1287 = vmatpush1.msra.mxu0 0.0
      %1288 = vmatprep.subr.mxu0 0.0
      %1289 = vmatpush1.msra.mxu0 0.0
      %1290 = vmatprep.subr.mxu0 0.0
      %1291 = vmatpush1.msra.mxu0 0.0
      %1292 = vmatprep.subr.mxu0 0.0
      %1293 = vmatpush1.msra.mxu0 0.0
      %1294 = vmatprep.subr.mxu0 0.0
      %1295 = vmatpush1.msra.mxu0 0.0
      %1296 = vmatprep.subr.mxu0 0.0
      %1297 = vmatpush1.msra.mxu0 0.0
      %1298 = vmatprep.subr.mxu0 0.0
      %1299 = vmatpush1.msra.mxu0 0.0
      %1300 = vmatprep.subr.mxu0 0.0
      %1301 = vmatpush1.msra.mxu0 0.0
      %1302 = vmatprep.subr.mxu0 0.0
      %1303 = vmatpush1.msra.mxu0 0.0
      %1304 = vmatprep.subr.mxu0 0.0
      %1305 = vmatpush1.msra.mxu0 0.0
      %1306 = vmatprep.subr.mxu0 0.0
      %1307 = vmatpush1.msra.mxu0 0.0
      %1308 = vmatprep.subr.mxu0 0.0
      %1309 = vmatpush1.msra.mxu0 0.0
      %1310 = vmatprep.subr.mxu0 0.0
      %1311 = vmatpush1.msra.mxu0 0.0
      %1312 = vmatprep.subr.mxu0 0.0
      %1313 = vmatpush1.msra.mxu0 0.0
      %1314 = vmatprep.subr.mxu0 0.0
      %1315 = vmatpush1.msra.mxu0 0.0
      %1316 = vmatprep.subr.mxu0 0.0
      %1317 = vmatpush1.msra.mxu0 0.0
      %1318 = vmatprep.subr.mxu0 0.0
      %1319 = vmatpush1.msra.mxu0 0.0
      %1320 = vmatprep.mubr.f32.mxu0 0.0
      %1321 = vmatmul.mubr.f32.gmra.mrb[0].mxu0 %v1251
      %v1322 = vpop.f32.mrb[0].mxu0
      %v1323 = vadd.f32 %v1248, %v1322
      %v1324 = vpop.f32.mrb[0].mxu0
      %1325 = vmatprep.mubr.f32.mxu0 0.0
      %1326 = vmatmul.mubr.f32.gmra.mrb[0].mxu0 %v1254
      %v1327 = vpop.f32.mrb[0].mxu0
      %v1328 = vadd.f32 %v1248, %v1327
      %v1329 = vpop.f32.mrb[0].mxu0
      %1330 = vdwg.mxu0
      %v1331 = vmax.f32 %v1323, 0.0
      %v1332 = vmax.f32 %v1328, 0.0
      %v1334 = vlaneseq
      %v1335 = vshrl.u32 %v1334, 7
      %v1336 = vsub.s32 0, %v1335
      %v1337 = vrot.slane %v533, %v1336
      %v1340 = vsel %vm1001, %v1331, 0
      %v1343 = vsel %vm1001, %v1332, 0
      %1345 = vmatprep.subr.mxu0 0.0
      %1346 = vmatpush1.msra.mxu0 %v529
      %1347 = vmatprep.subr.mxu0 0.0
      %1348 = vmatpush1.msra.mxu0 %v530
      %1349 = vmatprep.subr.mxu0 0.0
      %1350 = vmatpush1.msra.mxu0 %v531
      %1351 = vmatprep.subr.mxu0 0.0
      %1352 = vmatpush1.msra.mxu0 %v532
      %1353 = vmatprep.subr.mxu0 0.0
      %1354 = vmatpush1.msra.mxu0 0.0
      %1355 = vmatprep.subr.mxu0 0.0
      %1356 = vmatpush1.msra.mxu0 0.0
      %1357 = vmatprep.subr.mxu0 0.0
      %1358 = vmatpush1.msra.mxu0 0.0
      %1359 = vmatprep.subr.mxu0 0.0
      %1360 = vmatpush1.msra.mxu0 0.0
      %1361 = vmatprep.subr.mxu0 0.0
      %1362 = vmatpush1.msra.mxu0 0.0
      %1363 = vmatprep.subr.mxu0 0.0
      %1364 = vmatpush1.msra.mxu0 0.0
      %1365 = vmatprep.subr.mxu0 0.0
      %1366 = vmatpush1.msra.mxu0 0.0
      %1367 = vmatprep.subr.mxu0 0.0
      %1368 = vmatpush1.msra.mxu0 0.0
      %1369 = vmatprep.subr.mxu0 0.0
      %1370 = vmatpush1.msra.mxu0 0.0
      %1371 = vmatprep.subr.mxu0 0.0
      %1372 = vmatpush1.msra.mxu0 0.0
      %1373 = vmatprep.subr.mxu0 0.0
      %1374 = vmatpush1.msra.mxu0 0.0
      %1375 = vmatprep.subr.mxu0 0.0
      %1376 = vmatpush1.msra.mxu0 0.0
      %1377 = vmatprep.subr.mxu0 0.0
      %1378 = vmatpush1.msra.mxu0 0.0
      %1379 = vmatprep.subr.mxu0 0.0
      %1380 = vmatpush1.msra.mxu0 0.0
      %1381 = vmatprep.subr.mxu0 0.0
      %1382 = vmatpush1.msra.mxu0 0.0
      %1383 = vmatprep.subr.mxu0 0.0
      %1384 = vmatpush1.msra.mxu0 0.0
      %1385 = vmatprep.subr.mxu0 0.0
      %1386 = vmatpush1.msra.mxu0 0.0
      %1387 = vmatprep.subr.mxu0 0.0
      %1388 = vmatpush1.msra.mxu0 0.0
      %1389 = vmatprep.subr.mxu0 0.0
      %1390 = vmatpush1.msra.mxu0 0.0
      %1391 = vmatprep.subr.mxu0 0.0
      %1392 = vmatpush1.msra.mxu0 0.0
      %1393 = vmatprep.subr.mxu0 0.0
      %1394 = vmatpush1.msra.mxu0 0.0
      %1395 = vmatprep.subr.mxu0 0.0
      %1396 = vmatpush1.msra.mxu0 0.0
      %1397 = vmatprep.subr.mxu0 0.0
      %1398 = vmatpush1.msra.mxu0 0.0
      %1399 = vmatprep.subr.mxu0 0.0
      %1400 = vmatpush1.msra.mxu0 0.0
      %1401 = vmatprep.subr.mxu0 0.0
      %1402 = vmatpush1.msra.mxu0 0.0
      %1403 = vmatprep.subr.mxu0 0.0
      %1404 = vmatpush1.msra.mxu0 0.0
      %1405 = vmatprep.subr.mxu0 0.0
      %1406 = vmatpush1.msra.mxu0 0.0
      %1407 = vmatprep.subr.mxu0 0.0
      %1408 = vmatpush1.msra.mxu0 0.0
      %1409 = vmatprep.mubr.f32.mxu0 0.0
      %1410 = vmatmul.mubr.f32.gmra.mrb[0].mxu0 %v1340
      %v1411 = vpop.f32.mrb[0].mxu0
      %v1412 = vadd.f32 %v1337, %v1411
      %v1413 = vpop.f32.mrb[0].mxu0
      %1414 = vmatprep.mubr.f32.mxu0 0.0
      %1415 = vmatmul.mubr.f32.gmra.mrb[0].mxu0 %v1343
      %v1416 = vpop.f32.mrb[0].mxu0
      %v1417 = vadd.f32 %v1337, %v1416
      %v1418 = vpop.f32.mrb[0].mxu0
      %1419 = vdwg.mxu0
      %v1420 = vadd.f32 %v1242, %v1412
      %v1421 = vadd.f32 %v1243, %v1417
      %v1422 = vsel %vm1001, %v1420, 0.0
      %1423 = vadd.xlane.f32.xlu0 %v1422
      %v1424 = vpop.xlane.xlu0 %1423
      %v1425 = vsel %vm1203, %v1421, 0.0
      %1426 = vadd.xlane.f32.xlu0 %v1425
      %v1427 = vpop.xlane.xlu0 %1426
      %v1428 = vmul.f32 %v1424, %v1207
      %v1429 = vmul.f32 %v1427, %v1207
      %v1430 = vsub.f32 %v1420, %v1428
      %v1431 = vsub.f32 %v1421, %v1429
      %v1432 = vmul.f32 %v1430, %v1430
      %v1433 = vmul.f32 %v1431, %v1431
      %v1434 = vsel %vm1001, %v1432, 0.0
      %1435 = vadd.xlane.f32.xlu0 %v1434
      %v1436 = vpop.xlane.xlu0 %1435
      %v1437 = vsel %vm1203, %v1433, 0.0
      %1438 = vadd.xlane.f32.xlu0 %v1437
      %v1439 = vpop.xlane.xlu0 %1438
      %v1440 = vmul.f32 %v1436, %v1207
      %v1441 = vmul.f32 %v1439, %v1207
      %v1442 = vadd.f32 %v1440, 1e-05
      %v1443 = vadd.f32 %v1441, 1e-05
      %v1444 = vrsqrt.pop %v1442
      %v1445 = vrsqrt.pop %v1443
      %v1446 = vmul.f32 %v1430, %v1444
      %v1447 = vmul.f32 %v1431, %v1445
      %v1449 = vlaneseq
      %v1450 = vshrl.u32 %v1449, 7
      %v1451 = vsub.s32 0, %v1450
      %v1452 = vrot.slane %v534, %v1451
      %v1454 = vmul.f32 %v1446, %v1452
      %v1455 = vmul.f32 %v1447, %v1452
      %v1457 = vlaneseq
      %v1458 = vshrl.u32 %v1457, 7
      %v1459 = vsub.s32 0, %v1458
      %v1460 = vrot.slane %v535, %v1459
      %v1462 = vadd.f32 %v1454, %v1460
      %v1463 = vadd.f32 %v1455, %v1460
      %1464 = vst.msk [vmem:[%s487] sm:$0xff] %vm1001, %v1462
      %1465 = vst.msk [vmem:[%s487 + $0x8] sm:$0xf] %vm1203, %v1463
      %p1466 = scmp.lt.s32.totalorder %s25, 1
      %s1467 = scalar_select %p1466, %s25, 1
      %s1468 = smul.addr %s1467, 2
      %s1469 = smul.addr %s1468, 8
      %s1470 = scalar_lea.vmem %s14, %s1469
      // Predicated region
      $region77: #{tpu_custom_call.1} parent=75 // pred_check
        %p1471 = pneg %p347
      $region78: #{tpu_custom_call.1} parent=75 // pred_check_branch
        %1473 = sbr.rel (%p1471) target = $region80
      $region79: #{tpu_custom_call.1} parent=75 // pred_region
        _
      $region80: #{tpu_custom_call.1} parent=75 // pred_fallthru
        _
    $region76: #{tpu_custom_call.1} parent=5 // pred_fallthru
      _
    %p1474 = scmp.le.s32.totalorder 2, %s20
    // Predicated region
    $region81: #{tpu_custom_call.1} parent=5 // pred_check
      %p1475 = pneg %p1474
    $region82: #{tpu_custom_call.1} parent=5 // pred_check_branch
      %1477 = sbr.rel (%p1475) target = $region84
    $region83: #{tpu_custom_call.1} parent=5 // pred_region
      %s1478 = ssub.s32 %s20, 2
      // Predicated region
      $region85: #{tpu_custom_call.1} parent=83 // pred_check
        %p1479 = pneg %p353
      $region86: #{tpu_custom_call.1} parent=83 // pred_check_branch
        %1481 = sbr.rel (%p1479) target = $region88
      $region87: #{tpu_custom_call.1} parent=83 // pred_region
        %p1482 = scmp.lt.s32.totalorder %s26, 1
        %s1483 = scalar_select %p1482, %s26, 1
        %s1484 = smul.addr %s1483, 2
        %s1485 = smul.addr %s1484, 8
        %s1486 = scalar_lea.vmem %s14, %s1485
      $region88: #{tpu_custom_call.1} parent=83 // pred_fallthru
        _
    $region84: #{tpu_custom_call.1} parent=5 // pred_fallthru
      _
  $region6: #{tpu_custom_call.1} parent=0 // loop_footer
    %s24 = sadd.s32 1, %s20
  $region7: #{tpu_custom_call.1} parent=0 // loop_footer_branch
    %19 = sbr.rel target = $region3
  $region8: #{tpu_custom_call.1} parent=0 // loop_exit
    _

</llo_original>
